<compile_context>
chip_gen: v5e
topology: v5e:2x2
jax: 0.10.0
libtpu: 0.0.40
codegen_flags: <defaults>
</compile_context>

<pallas_src>
import jax
import jax.numpy as jnp
from jax import lax
from jax.experimental import pallas as pl
from jax.experimental.pallas import tpu as pltpu


def _round_up(x, m):
    return ((x + m - 1) // m) * m


def lstm_fused_kernel(x_ref,    # (T*Bp, Pp) f32   padded input sequence (rows = t*Bp + b)
                      h0_ref,   # (1, Bp, H) f32   this layer's initial hidden
                      c0_ref,   # (1, Bp, H) f32   this layer's initial cell
                      wx_ref,   # (1, Pp, 4H) bf16 input-projection weights (zero-padded rows)
                      wh_ref,   # (1, H, 4H) bf16  recurrent weights
                      b_ref,    # (1, 1, 4H) f32   bias
                      out_ref,  # (T*Bp, Pp) f32   hidden stream (revisited block, VMEM-resident)
                      hf_ref,   # (1, Bp, H) f32   final hidden (this layer)
                      cf_ref,   # (1, Bp, H) f32   final cell (this layer)
                      xw_ref):  # scratch (T*Bp, 4H) f32  hoisted projection
    j = pl.program_id(0)
    _, Bp, H = h0_ref.shape
    TB = out_ref.shape[0]
    T = TB // Bp

    # Layer 0 seeds the resident stream with the (padded) input sequence; every
    # later layer consumes the previous layer's hidden stream in place.
    @pl.when(j == 0)
    def _():
        out_ref[...] = x_ref[...]

    # Hoisted, batched input projection with the bias folded in: one big MXU
    # matmul per layer instead of T tiny ones inside the serial recurrence.
    # (Zero-padded weight rows make the unused stream lanes no-ops.)
    xw_ref[...] = (
        jnp.dot(out_ref[...].astype(jnp.bfloat16), wx_ref[0],
                preferred_element_type=jnp.float32)
        + b_ref[0]
    )

    # Recurrent weight stays resident for the whole loop (bf16 halves footprint).
    w_h = wh_ref[0]                                        # (H, 4H)

    # Lane-index mask, hoisted out of the recurrence: lanes [2H, 3H) take tanh
    # (candidate), every other lane takes sigmoid (f, i, o gates).
    lane = lax.broadcasted_iota(jnp.int32, (Bp, 4 * H), 1)
    tanh_lane = (lane >= 2 * H) & (lane < 3 * H)

    def step(t, carry):
        h, c = carry
        row = pl.multiple_of(t * Bp, Bp)                   # Bp is a multiple of 8
        # Only the (Bp,H)@(H,4H) recurrent matmul stays on the critical path.
        gates = (
            jnp.dot(h.astype(jnp.bfloat16), w_h,
                    preferred_element_type=jnp.float32)
            + xw_ref[pl.ds(row, Bp), :]
        )                                                  # (Bp, 4H) f32
        # Full-vreg activations (2 EUP pushes over the whole gate tile) + lane
        # select; slice only when forming c_new / h_new.
        sig = jax.nn.sigmoid(gates)
        th = jnp.tanh(gates)
        act = jnp.where(tanh_lane, th, sig)
        f_g = act[:, :H]
        i_g = act[:, H:2 * H]
        cand = act[:, 2 * H:3 * H]
        o_g = act[:, 3 * H:]
        c_new = f_g * c + i_g * cand
        h_new = o_g * jnp.tanh(c_new)
        # Write this step's hidden state into the resident stream; it is both
        # the next layer's input and (after the last layer) the kernel output.
        out_ref[pl.ds(row, Bp), pl.ds(0, H)] = h_new
        return (h_new, c_new)

    # T is static; fully unroll short sequences so the scheduler can overlap
    # the MXU/EUP latency chain across steps; partial unroll for long ones to
    # stay inside the 64-vreg budget.
    h_f, c_f = lax.fori_loop(0, T, step, (h0_ref[0], c0_ref[0]),
                             unroll=True if T <= 16 else 8)
    hf_ref[0] = h_f
    cf_ref[0] = c_f


@jax.jit
def lstm_forward(x, hidden_state, cell_state, weights, biases):
    """Multi-layer unidirectional LSTM (matches LSTM.forward, bidirectional=False).

    x: (T, B, input_dim); hidden_state, cell_state: (layers, B, H)
    weights[j]: (D_j + H, 4H); biases[j]: (4H,)
    Returns output (T, B, H), (h_final (layers, B, H), c_final (layers, B, H)).
    """
    T, B, D = x.shape
    layers, _, H = hidden_state.shape

    Bp = _round_up(max(B, 8), 8)          # sublane-pad the batch
    Pp = _round_up(max(D, H), 128)        # lane-pad the stream/feature axis

    # Padded, time-major-flattened input stream.
    x_pad = jnp.zeros((T, Bp, Pp), jnp.float32).at[:, :B, :D].set(x)
    x_flat = x_pad.reshape(T * Bp, Pp)

    h0 = jnp.zeros((layers, Bp, H), jnp.float32).at[:, :B, :].set(hidden_state)
    c0 = jnp.zeros((layers, Bp, H), jnp.float32).at[:, :B, :].set(cell_state)

    # Stack per-layer parameters: split W into input / recurrent parts, pad the
    # input part to Pp rows (zero rows are no-ops), cast MXU weights to bf16.
    wx = jnp.zeros((layers, Pp, 4 * H), jnp.bfloat16)
    wh = jnp.zeros((layers, H, 4 * H), jnp.bfloat16)
    bb = jnp.zeros((layers, 1, 4 * H), jnp.float32)
    for j in range(layers):
        d_j = weights[j].shape[0] - H
        wx = wx.at[j, :d_j, :].set(weights[j][:d_j].astype(jnp.bfloat16))
        wh = wh.at[j, :, :].set(weights[j][d_j:].astype(jnp.bfloat16))
        bb = bb.at[j, 0, :].set(biases[j].astype(jnp.float32))

    out_flat, h_f, c_f = pl.pallas_call(
        lstm_fused_kernel,
        grid=(layers,),
        in_specs=[
            pl.BlockSpec((T * Bp, Pp), lambda j: (0, 0)),       # x (resident)
            pl.BlockSpec((1, Bp, H), lambda j: (j, 0, 0)),      # h0[j]
            pl.BlockSpec((1, Bp, H), lambda j: (j, 0, 0)),      # c0[j]
            pl.BlockSpec((1, Pp, 4 * H), lambda j: (j, 0, 0)),  # wx[j]
            pl.BlockSpec((1, H, 4 * H), lambda j: (j, 0, 0)),   # wh[j]
            pl.BlockSpec((1, 1, 4 * H), lambda j: (j, 0, 0)),   # bias[j]
        ],
        out_specs=(
            pl.BlockSpec((T * Bp, Pp), lambda j: (0, 0)),       # hidden stream (resident)
            pl.BlockSpec((1, Bp, H), lambda j: (j, 0, 0)),      # h_final[j]
            pl.BlockSpec((1, Bp, H), lambda j: (j, 0, 0)),      # c_final[j]
        ),
        out_shape=(
            jax.ShapeDtypeStruct((T * Bp, Pp), jnp.float32),
            jax.ShapeDtypeStruct((layers, Bp, H), jnp.float32),
            jax.ShapeDtypeStruct((layers, Bp, H), jnp.float32),
        ),
        scratch_shapes=[pltpu.VMEM((T * Bp, 4 * H), jnp.float32)],
        input_output_aliases={1: 1, 2: 2},   # h0 -> h_final, c0 -> c_final
        compiler_params=pltpu.CompilerParams(
            dimension_semantics=("arbitrary",),   # layers are serially dependent
        ),
    )(x_flat, h0, c0, wx, wh, bb)

    out = out_flat.reshape(T, Bp, Pp)[:, :B, :H]
    return out, (h_f[:, :B, :], c_f[:, :B, :])


def lstm_reference(x, hidden_state, cell_state, weights, biases,
                   matmul_dtype=jnp.float32):
    """Pure-JAX reference matching the PyTorch forward exactly.

    matmul_dtype=jnp.bfloat16 mimics the kernel's bf16 MXU inputs (f32 accum).
    """
    layers = len(weights)
    H = hidden_state.shape[-1]
    output = x
    h_fs, c_fs = [], []
    for j in range(layers):
        w, b = weights[j], biases[j]

        def step(carry, x_t, w=w, b=b):
            h, c = carry
            xc = jnp.concatenate([x_t, h], axis=-1)               # (B, D+H)
            gates = jnp.dot(xc.astype(matmul_dtype), w.astype(matmul_dtype),
                            preferred_element_type=jnp.float32) + b
            f_g = jax.nn.sigmoid(gates[:, :H])
            i_g = jax.nn.sigmoid(gates[:, H:2 * H])
            cand = jnp.tanh(gates[:, 2 * H:3 * H])
            o_g = jax.nn.sigmoid(gates[:, 3 * H:])
            c_new = f_g * c + i_g * cand
            h_new = o_g * jnp.tanh(c_new)
            return (h_new, c_new), h_new

        (h, c), outs = lax.scan(step, (hidden_state[j], cell_state[j]), output)
        output = outs
        h_fs.append(h)
        c_fs.append(c)
    return output, (jnp.stack(h_fs, axis=0), jnp.stack(c_fs, axis=0))


if __name__ == "__main__":
    # Small shapes consistent with LSTM.forward:
    #   x: (seq, batch, input_dim), hidden/cell: (layers, batch, hidden_dim)
    T, B, input_dim, hidden_dim, layers = 8, 2, 16, 32, 2

    key = jax.random.PRNGKey(0)
    keys = jax.random.split(key, 3 + 2 * layers)
    x = jax.random.normal(keys[0], (T, B, input_dim), dtype=jnp.float32)
    hidden0 = jax.random.normal(keys[1], (layers, B, hidden_dim),
                                dtype=jnp.float32)
    cell0 = jax.random.normal(keys[2], (layers, B, hidden_dim),
                              dtype=jnp.float32)

    weights, biases = [], []
    for j in range(layers):
        d_j = input_dim if j == 0 else hidden_dim
        scale = 1.0 / jnp.sqrt(jnp.float32(d_j + hidden_dim))
        weights.append(scale * jax.random.normal(
            keys[3 + 2 * j], (d_j + hidden_dim, 4 * hidden_dim),
            dtype=jnp.float32))
        biases.append(0.1 * jax.random.normal(
            keys[4 + 2 * j], (4 * hidden_dim,), dtype=jnp.float32))

    out, (h_final, c_final) = lstm_forward(x, hidden0, cell0, weights, biases)
    jax.block_until_ready((out, h_final, c_final))

    assert out.shape == (T, B, hidden_dim)
    assert h_final.shape == (layers, B, hidden_dim)
    assert c_final.shape == (layers, B, hidden_dim)

    # Tight check vs. a reference that mimics the kernel's bf16 MXU inputs.
    out_bf, (h_bf, c_bf) = lstm_reference(
        x, hidden0, cell0, weights, biases, matmul_dtype=jnp.bfloat16)
    assert jnp.allclose(out, out_bf, atol=5e-3, rtol=5e-3)
    assert jnp.allclose(h_final, h_bf, atol=5e-3, rtol=5e-3)
    assert jnp.allclose(c_final, c_bf, atol=5e-3, rtol=5e-3)

    # Loose check vs. the exact f32 PyTorch-semantics reference (bf16 weights).
    out_f32, (h_f32, c_f32) = lstm_reference(x, hidden0, cell0, weights, biases)
    assert jnp.allclose(out, out_f32, atol=5e-2, rtol=5e-2)
    assert jnp.allclose(h_final, h_f32, atol=5e-2, rtol=5e-2)
    assert jnp.allclose(c_final, c_f32, atol=5e-2, rtol=5e-2)

    print("KERNEL_OK")
</pallas_src>

<mosaic_0001>
module attributes {stable_mosaic.version = 11 : i64} {
  func.func @lstm_fused_kernel(%arg0: i32, %arg1: memref<64x128xf32, #tpu.memory_space<vmem>>, %arg2: memref<1x8x32xf32, #tpu.memory_space<vmem>>, %arg3: memref<1x8x32xf32, #tpu.memory_space<vmem>>, %arg4: memref<1x128x128xbf16, #tpu.memory_space<vmem>>, %arg5: memref<1x32x128xbf16, #tpu.memory_space<vmem>>, %arg6: memref<1x1x128xf32, #tpu.memory_space<vmem>>, %arg7: memref<64x128xf32, #tpu.memory_space<vmem>>, %arg8: memref<1x8x32xf32, #tpu.memory_space<vmem>>, %arg9: memref<1x8x32xf32, #tpu.memory_space<vmem>>, %arg10: memref<64x128xf32, #tpu.memory_space<vmem>>) attributes {dimension_semantics = [#tpu.dimension_semantics<arbitrary>], iteration_bounds = array<i64: 2>, scalar_prefetch = 0 : i64, scratch_operands = 1 : i64, tpu.core_type = #tpu.core_type<tc>, window_params = [{pipeline_mode = #tpu.pipeline_mode<synchronous>, transform_indices = @transform_0, window_bounds = array<i64: 64, 128>}, {transform_indices = @transform_1, window_bounds = array<i64: 1, 8, 32>}, {transform_indices = @transform_2, window_bounds = array<i64: 1, 8, 32>}, {transform_indices = @transform_3, window_bounds = array<i64: 1, 128, 128>}, {transform_indices = @transform_4, window_bounds = array<i64: 1, 32, 128>}, {transform_indices = @transform_5, window_bounds = array<i64: 1, 1, 128>}, {pipeline_mode = #tpu.pipeline_mode<synchronous>, transform_indices = @transform_6, window_bounds = array<i64: 64, 128>}, {transform_indices = @transform_7, window_bounds = array<i64: 1, 8, 32>}, {transform_indices = @transform_8, window_bounds = array<i64: 1, 8, 32>}]} {
    %c0_i32 = arith.constant 0 : i32
    %0 = arith.cmpi eq, %arg0, %c0_i32 : i32
    %1 = arith.extui %0 : i1 to i32
    %c0_i32_0 = arith.constant 0 : i32
    %2 = arith.cmpi ne, %1, %c0_i32_0 : i32
    scf.if %2 {
      %c0_66 = arith.constant 0 : index
      %c0_67 = arith.constant 0 : index
      %231 = vector.load %arg1[%c0_66, %c0_67] : memref<64x128xf32, #tpu.memory_space<vmem>>, vector<64x128xf32>
      %c0_68 = arith.constant 0 : index
      %c0_69 = arith.constant 0 : index
      %232 = vector.load %arg7[%c0_68, %c0_69] : memref<64x128xf32, #tpu.memory_space<vmem>>, vector<64x128xf32>
      tpu.vector_store %arg7[%c0_68, %c0_69], %231 {strides = array<i32>} : memref<64x128xf32, #tpu.memory_space<vmem>>, vector<64x128xf32>,
    } else {
    }
    %c0 = arith.constant 0 : index
    %c0_1 = arith.constant 0 : index
    %3 = vector.load %arg7[%c0, %c0_1] : memref<64x128xf32, #tpu.memory_space<vmem>>, vector<64x128xf32>
    %4 = arith.truncf %3 : vector<64x128xf32> to vector<64x128xbf16>
    %c0_2 = arith.constant 0 : index
    %c0_3 = arith.constant 0 : index
    %c0_4 = arith.constant 0 : index
    %5 = vector.load %arg4[%c0_2, %c0_3, %c0_4] : memref<1x128x128xbf16, #tpu.memory_space<vmem>>, vector<1x128x128xbf16>
    %6 = vector.shape_cast %5 : vector<1x128x128xbf16> to vector<128x128xbf16>
    %cst = arith.constant dense<0.000000e+00> : vector<64x128xf32>
    %7 = tpu.matmul %4, %6, %cst {dimension_numbers = #tpu.dot_dimension_numbers<[1], [0], [0], [1], [0, 0, 1, 1], [], []>} : vector<64x128xbf16>, vector<128x128xbf16>, vector<64x128xf32> -> vector<64x128xf32>
    %c0_5 = arith.constant 0 : index
    %c0_6 = arith.constant 0 : index
    %c0_7 = arith.constant 0 : index
    %8 = vector.load %arg6[%c0_5, %c0_6, %c0_7] : memref<1x1x128xf32, #tpu.memory_space<vmem>>, vector<1x1x128xf32>
    %9 = vector.shape_cast %8 : vector<1x1x128xf32> to vector<1x128xf32>
    %10 = vector.broadcast %9 : vector<1x128xf32> to vector<64x128xf32>
    %11 = arith.addf %7, %10 : vector<64x128xf32>
    %c0_8 = arith.constant 0 : index
    %c0_9 = arith.constant 0 : index
    %12 = vector.load %arg10[%c0_8, %c0_9] : memref<64x128xf32, #tpu.memory_space<vmem>>, vector<64x128xf32>
    tpu.vector_store %arg10[%c0_8, %c0_9], %11 {strides = array<i32>} : memref<64x128xf32, #tpu.memory_space<vmem>>, vector<64x128xf32>,
    %c0_10 = arith.constant 0 : index
    %c0_11 = arith.constant 0 : index
    %c0_12 = arith.constant 0 : index
    %13 = vector.load %arg5[%c0_10, %c0_11, %c0_12] : memref<1x32x128xbf16, #tpu.memory_space<vmem>>, vector<1x32x128xbf16>
    %14 = vector.shape_cast %13 : vector<1x32x128xbf16> to vector<32x128xbf16>
    %15 = tpu.iota {dimensions = array<i32: 1>} : vector<8x128xi32>
    %c64_i32 = arith.constant 64 : i32
    %16 = vector.broadcast %c64_i32 : i32 to vector<8x128xi32>
    %17 = arith.cmpi sge, %15, %16 : vector<8x128xi32>
    %c96_i32 = arith.constant 96 : i32
    %18 = vector.broadcast %c96_i32 : i32 to vector<8x128xi32>
    %19 = arith.cmpi slt, %15, %18 : vector<8x128xi32>
    %20 = arith.andi %17, %19 : vector<8x128xi1>
    %c0_13 = arith.constant 0 : index
    %c0_14 = arith.constant 0 : index
    %c0_15 = arith.constant 0 : index
    %21 = vector.load %arg2[%c0_13, %c0_14, %c0_15] : memref<1x8x32xf32, #tpu.memory_space<vmem>>, vector<1x8x32xf32>
    %22 = vector.shape_cast %21 : vector<1x8x32xf32> to vector<8x32xf32>
    %c0_16 = arith.constant 0 : index
    %c0_17 = arith.constant 0 : index
    %c0_18 = arith.constant 0 : index
    %23 = vector.load %arg3[%c0_16, %c0_17, %c0_18] : memref<1x8x32xf32, #tpu.memory_space<vmem>>, vector<1x8x32xf32>
    %24 = vector.shape_cast %23 : vector<1x8x32xf32> to vector<8x32xf32>
    %c0_i32_19 = arith.constant 0 : i32
    %c8_i32 = arith.constant 8 : i32
    %25 = arith.muli %c0_i32_19, %c8_i32 : i32
    %26 = tpu.assume_multiple %25, 8 : i32
    %27 = arith.truncf %22 : vector<8x32xf32> to vector<8x32xbf16>
    %cst_20 = arith.constant dense<0.000000e+00> : vector<8x128xf32>
    %28 = tpu.matmul %27, %14, %cst_20 {dimension_numbers = #tpu.dot_dimension_numbers<[1], [0], [0], [1], [0, 0, 1, 1], [], []>} : vector<8x32xbf16>, vector<32x128xbf16>, vector<8x128xf32> -> vector<8x128xf32>
    %29 = arith.index_cast %26 : i32 to index
    %c0_21 = arith.constant 0 : index
    %30 = vector.load %arg10[%29, %c0_21] : memref<64x128xf32, #tpu.memory_space<vmem>>, vector<8x128xf32>
    %31 = arith.addf %28, %30 : vector<8x128xf32>
    %32 = arith.negf %31 : vector<8x128xf32>
    %33 = math.exp %32 : vector<8x128xf32>
    %cst_22 = arith.constant 1.000000e+00 : f32
    %34 = vector.broadcast %cst_22 : f32 to vector<8x128xf32>
    %35 = arith.addf %34, %33 : vector<8x128xf32>
    %36 = arith.divf %34, %35 : vector<8x128xf32>
    %37 = math.tanh %31 : vector<8x128xf32>
    %38 = arith.select %20, %37, %36 : vector<8x128xi1>, vector<8x128xf32>
    %39 = vector.extract_strided_slice %38 {offsets = [0, 0], sizes = [8, 32], strides = [1, 1]} : vector<8x128xf32> to vector<8x32xf32>
    %40 = vector.extract_strided_slice %38 {offsets = [0, 32], sizes = [8, 32], strides = [1, 1]} : vector<8x128xf32> to vector<8x32xf32>
    %41 = vector.extract_strided_slice %38 {offsets = [0, 64], sizes = [8, 32], strides = [1, 1]} : vector<8x128xf32> to vector<8x32xf32>
    %42 = vector.extract_strided_slice %38 {offsets = [0, 96], sizes = [8, 32], strides = [1, 1]} : vector<8x128xf32> to vector<8x32xf32>
    %43 = arith.mulf %39, %24 : vector<8x32xf32>
    %44 = arith.mulf %40, %41 : vector<8x32xf32>
    %45 = arith.addf %43, %44 : vector<8x32xf32>
    %46 = math.tanh %45 : vector<8x32xf32>
    %47 = arith.mulf %42, %46 : vector<8x32xf32>
    %48 = arith.index_cast %26 : i32 to index
    %c0_23 = arith.constant 0 : index
    %49 = vector.load %arg7[%48, %c0_23] : memref<64x128xf32, #tpu.memory_space<vmem>>, vector<8x32xf32>
    tpu.vector_store %arg7[%48, %c0_23], %47 {strides = array<i32>} : memref<64x128xf32, #tpu.memory_space<vmem>>, vector<8x32xf32>,
    %c1_i32 = arith.constant 1 : i32
    %c8_i32_24 = arith.constant 8 : i32
    %50 = arith.muli %c1_i32, %c8_i32_24 : i32
    %51 = tpu.assume_multiple %50, 8 : i32
    %52 = arith.truncf %47 : vector<8x32xf32> to vector<8x32xbf16>
    %cst_25 = arith.constant dense<0.000000e+00> : vector<8x128xf32>
    %53 = tpu.matmul %52, %14, %cst_25 {dimension_numbers = #tpu.dot_dimension_numbers<[1], [0], [0], [1], [0, 0, 1, 1], [], []>} : vector<8x32xbf16>, vector<32x128xbf16>, vector<8x128xf32> -> vector<8x128xf32>
    %54 = arith.index_cast %51 : i32 to index
    %c0_26 = arith.constant 0 : index
    %55 = vector.load %arg10[%54, %c0_26] : memref<64x128xf32, #tpu.memory_space<vmem>>, vector<8x128xf32>
    %56 = arith.addf %53, %55 : vector<8x128xf32>
    %57 = arith.negf %56 : vector<8x128xf32>
    %58 = math.exp %57 : vector<8x128xf32>
    %cst_27 = arith.constant 1.000000e+00 : f32
    %59 = vector.broadcast %cst_27 : f32 to vector<8x128xf32>
    %60 = arith.addf %59, %58 : vector<8x128xf32>
    %61 = arith.divf %59, %60 : vector<8x128xf32>
    %62 = math.tanh %56 : vector<8x128xf32>
    %63 = arith.select %20, %62, %61 : vector<8x128xi1>, vector<8x128xf32>
    %64 = vector.extract_strided_slice %63 {offsets = [0, 0], sizes = [8, 32], strides = [1, 1]} : vector<8x128xf32> to vector<8x32xf32>
    %65 = vector.extract_strided_slice %63 {offsets = [0, 32], sizes = [8, 32], strides = [1, 1]} : vector<8x128xf32> to vector<8x32xf32>
    %66 = vector.extract_strided_slice %63 {offsets = [0, 64], sizes = [8, 32], strides = [1, 1]} : vector<8x128xf32> to vector<8x32xf32>
    %67 = vector.extract_strided_slice %63 {offsets = [0, 96], sizes = [8, 32], strides = [1, 1]} : vector<8x128xf32> to vector<8x32xf32>
    %68 = arith.mulf %64, %45 : vector<8x32xf32>
    %69 = arith.mulf %65, %66 : vector<8x32xf32>
    %70 = arith.addf %68, %69 : vector<8x32xf32>
    %71 = math.tanh %70 : vector<8x32xf32>
    %72 = arith.mulf %67, %71 : vector<8x32xf32>
    %73 = arith.index_cast %51 : i32 to index
    %c0_28 = arith.constant 0 : index
    %74 = vector.load %arg7[%73, %c0_28] : memref<64x128xf32, #tpu.memory_space<vmem>>, vector<8x32xf32>
    tpu.vector_store %arg7[%73, %c0_28], %72 {strides = array<i32>} : memref<64x128xf32, #tpu.memory_space<vmem>>, vector<8x32xf32>,
    %c2_i32 = arith.constant 2 : i32
    %c8_i32_29 = arith.constant 8 : i32
    %75 = arith.muli %c2_i32, %c8_i32_29 : i32
    %76 = tpu.assume_multiple %75, 8 : i32
    %77 = arith.truncf %72 : vector<8x32xf32> to vector<8x32xbf16>
    %cst_30 = arith.constant dense<0.000000e+00> : vector<8x128xf32>
    %78 = tpu.matmul %77, %14, %cst_30 {dimension_numbers = #tpu.dot_dimension_numbers<[1], [0], [0], [1], [0, 0, 1, 1], [], []>} : vector<8x32xbf16>, vector<32x128xbf16>, vector<8x128xf32> -> vector<8x128xf32>
    %79 = arith.index_cast %76 : i32 to index
    %c0_31 = arith.constant 0 : index
    %80 = vector.load %arg10[%79, %c0_31] : memref<64x128xf32, #tpu.memory_space<vmem>>, vector<8x128xf32>
    %81 = arith.addf %78, %80 : vector<8x128xf32>
    %82 = arith.negf %81 : vector<8x128xf32>
    %83 = math.exp %82 : vector<8x128xf32>
    %cst_32 = arith.constant 1.000000e+00 : f32
    %84 = vector.broadcast %cst_32 : f32 to vector<8x128xf32>
    %85 = arith.addf %84, %83 : vector<8x128xf32>
    %86 = arith.divf %84, %85 : vector<8x128xf32>
    %87 = math.tanh %81 : vector<8x128xf32>
    %88 = arith.select %20, %87, %86 : vector<8x128xi1>, vector<8x128xf32>
    %89 = vector.extract_strided_slice %88 {offsets = [0, 0], sizes = [8, 32], strides = [1, 1]} : vector<8x128xf32> to vector<8x32xf32>
    %90 = vector.extract_strided_slice %88 {offsets = [0, 32], sizes = [8, 32], strides = [1, 1]} : vector<8x128xf32> to vector<8x32xf32>
    %91 = vector.extract_strided_slice %88 {offsets = [0, 64], sizes = [8, 32], strides = [1, 1]} : vector<8x128xf32> to vector<8x32xf32>
    %92 = vector.extract_strided_slice %88 {offsets = [0, 96], sizes = [8, 32], strides = [1, 1]} : vector<8x128xf32> to vector<8x32xf32>
    %93 = arith.mulf %89, %70 : vector<8x32xf32>
    %94 = arith.mulf %90, %91 : vector<8x32xf32>
    %95 = arith.addf %93, %94 : vector<8x32xf32>
    %96 = math.tanh %95 : vector<8x32xf32>
    %97 = arith.mulf %92, %96 : vector<8x32xf32>
    %98 = arith.index_cast %76 : i32 to index
    %c0_33 = arith.constant 0 : index
    %99 = vector.load %arg7[%98, %c0_33] : memref<64x128xf32, #tpu.memory_space<vmem>>, vector<8x32xf32>
    tpu.vector_store %arg7[%98, %c0_33], %97 {strides = array<i32>} : memref<64x128xf32, #tpu.memory_space<vmem>>, vector<8x32xf32>,
    %c3_i32 = arith.constant 3 : i32
    %c8_i32_34 = arith.constant 8 : i32
    %100 = arith.muli %c3_i32, %c8_i32_34 : i32
    %101 = tpu.assume_multiple %100, 8 : i32
    %102 = arith.truncf %97 : vector<8x32xf32> to vector<8x32xbf16>
    %cst_35 = arith.constant dense<0.000000e+00> : vector<8x128xf32>
    %103 = tpu.matmul %102, %14, %cst_35 {dimension_numbers = #tpu.dot_dimension_numbers<[1], [0], [0], [1], [0, 0, 1, 1], [], []>} : vector<8x32xbf16>, vector<32x128xbf16>, vector<8x128xf32> -> vector<8x128xf32>
    %104 = arith.index_cast %101 : i32 to index
    %c0_36 = arith.constant 0 : index
    %105 = vector.load %arg10[%104, %c0_36] : memref<64x128xf32, #tpu.memory_space<vmem>>, vector<8x128xf32>
    %106 = arith.addf %103, %105 : vector<8x128xf32>
    %107 = arith.negf %106 : vector<8x128xf32>
    %108 = math.exp %107 : vector<8x128xf32>
    %cst_37 = arith.constant 1.000000e+00 : f32
    %109 = vector.broadcast %cst_37 : f32 to vector<8x128xf32>
    %110 = arith.addf %109, %108 : vector<8x128xf32>
    %111 = arith.divf %109, %110 : vector<8x128xf32>
    %112 = math.tanh %106 : vector<8x128xf32>
    %113 = arith.select %20, %112, %111 : vector<8x128xi1>, vector<8x128xf32>
    %114 = vector.extract_strided_slice %113 {offsets = [0, 0], sizes = [8, 32], strides = [1, 1]} : vector<8x128xf32> to vector<8x32xf32>
    %115 = vector.extract_strided_slice %113 {offsets = [0, 32], sizes = [8, 32], strides = [1, 1]} : vector<8x128xf32> to vector<8x32xf32>
    %116 = vector.extract_strided_slice %113 {offsets = [0, 64], sizes = [8, 32], strides = [1, 1]} : vector<8x128xf32> to vector<8x32xf32>
    %117 = vector.extract_strided_slice %113 {offsets = [0, 96], sizes = [8, 32], strides = [1, 1]} : vector<8x128xf32> to vector<8x32xf32>
    %118 = arith.mulf %114, %95 : vector<8x32xf32>
    %119 = arith.mulf %115, %116 : vector<8x32xf32>
    %120 = arith.addf %118, %119 : vector<8x32xf32>
    %121 = math.tanh %120 : vector<8x32xf32>
    %122 = arith.mulf %117, %121 : vector<8x32xf32>
    %123 = arith.index_cast %101 : i32 to index
    %c0_38 = arith.constant 0 : index
    %124 = vector.load %arg7[%123, %c0_38] : memref<64x128xf32, #tpu.memory_space<vmem>>, vector<8x32xf32>
    tpu.vector_store %arg7[%123, %c0_38], %122 {strides = array<i32>} : memref<64x128xf32, #tpu.memory_space<vmem>>, vector<8x32xf32>,
    %c4_i32 = arith.constant 4 : i32
    %c8_i32_39 = arith.constant 8 : i32
    %125 = arith.muli %c4_i32, %c8_i32_39 : i32
    %126 = tpu.assume_multiple %125, 8 : i32
    %127 = arith.truncf %122 : vector<8x32xf32> to vector<8x32xbf16>
    %cst_40 = arith.constant dense<0.000000e+00> : vector<8x128xf32>
    %128 = tpu.matmul %127, %14, %cst_40 {dimension_numbers = #tpu.dot_dimension_numbers<[1], [0], [0], [1], [0, 0, 1, 1], [], []>} : vector<8x32xbf16>, vector<32x128xbf16>, vector<8x128xf32> -> vector<8x128xf32>
    %129 = arith.index_cast %126 : i32 to index
    %c0_41 = arith.constant 0 : index
    %130 = vector.load %arg10[%129, %c0_41] : memref<64x128xf32, #tpu.memory_space<vmem>>, vector<8x128xf32>
    %131 = arith.addf %128, %130 : vector<8x128xf32>
    %132 = arith.negf %131 : vector<8x128xf32>
    %133 = math.exp %132 : vector<8x128xf32>
    %cst_42 = arith.constant 1.000000e+00 : f32
    %134 = vector.broadcast %cst_42 : f32 to vector<8x128xf32>
    %135 = arith.addf %134, %133 : vector<8x128xf32>
    %136 = arith.divf %134, %135 : vector<8x128xf32>
    %137 = math.tanh %131 : vector<8x128xf32>
    %138 = arith.select %20, %137, %136 : vector<8x128xi1>, vector<8x128xf32>
    %139 = vector.extract_strided_slice %138 {offsets = [0, 0], sizes = [8, 32], strides = [1, 1]} : vector<8x128xf32> to vector<8x32xf32>
    %140 = vector.extract_strided_slice %138 {offsets = [0, 32], sizes = [8, 32], strides = [1, 1]} : vector<8x128xf32> to vector<8x32xf32>
    %141 = vector.extract_strided_slice %138 {offsets = [0, 64], sizes = [8, 32], strides = [1, 1]} : vector<8x128xf32> to vector<8x32xf32>
    %142 = vector.extract_strided_slice %138 {offsets = [0, 96], sizes = [8, 32], strides = [1, 1]} : vector<8x128xf32> to vector<8x32xf32>
    %143 = arith.mulf %139, %120 : vector<8x32xf32>
    %144 = arith.mulf %140, %141 : vector<8x32xf32>
    %145 = arith.addf %143, %144 : vector<8x32xf32>
    %146 = math.tanh %145 : vector<8x32xf32>
    %147 = arith.mulf %142, %146 : vector<8x32xf32>
    %148 = arith.index_cast %126 : i32 to index
    %c0_43 = arith.constant 0 : index
    %149 = vector.load %arg7[%148, %c0_43] : memref<64x128xf32, #tpu.memory_space<vmem>>, vector<8x32xf32>
    tpu.vector_store %arg7[%148, %c0_43], %147 {strides = array<i32>} : memref<64x128xf32, #tpu.memory_space<vmem>>, vector<8x32xf32>,
    %c5_i32 = arith.constant 5 : i32
    %c8_i32_44 = arith.constant 8 : i32
    %150 = arith.muli %c5_i32, %c8_i32_44 : i32
    %151 = tpu.assume_multiple %150, 8 : i32
    %152 = arith.truncf %147 : vector<8x32xf32> to vector<8x32xbf16>
    %cst_45 = arith.constant dense<0.000000e+00> : vector<8x128xf32>
    %153 = tpu.matmul %152, %14, %cst_45 {dimension_numbers = #tpu.dot_dimension_numbers<[1], [0], [0], [1], [0, 0, 1, 1], [], []>} : vector<8x32xbf16>, vector<32x128xbf16>, vector<8x128xf32> -> vector<8x128xf32>
    %154 = arith.index_cast %151 : i32 to index
    %c0_46 = arith.constant 0 : index
    %155 = vector.load %arg10[%154, %c0_46] : memref<64x128xf32, #tpu.memory_space<vmem>>, vector<8x128xf32>
    %156 = arith.addf %153, %155 : vector<8x128xf32>
    %157 = arith.negf %156 : vector<8x128xf32>
    %158 = math.exp %157 : vector<8x128xf32>
    %cst_47 = arith.constant 1.000000e+00 : f32
    %159 = vector.broadcast %cst_47 : f32 to vector<8x128xf32>
    %160 = arith.addf %159, %158 : vector<8x128xf32>
    %161 = arith.divf %159, %160 : vector<8x128xf32>
    %162 = math.tanh %156 : vector<8x128xf32>
    %163 = arith.select %20, %162, %161 : vector<8x128xi1>, vector<8x128xf32>
    %164 = vector.extract_strided_slice %163 {offsets = [0, 0], sizes = [8, 32], strides = [1, 1]} : vector<8x128xf32> to vector<8x32xf32>
    %165 = vector.extract_strided_slice %163 {offsets = [0, 32], sizes = [8, 32], strides = [1, 1]} : vector<8x128xf32> to vector<8x32xf32>
    %166 = vector.extract_strided_slice %163 {offsets = [0, 64], sizes = [8, 32], strides = [1, 1]} : vector<8x128xf32> to vector<8x32xf32>
    %167 = vector.extract_strided_slice %163 {offsets = [0, 96], sizes = [8, 32], strides = [1, 1]} : vector<8x128xf32> to vector<8x32xf32>
    %168 = arith.mulf %164, %145 : vector<8x32xf32>
    %169 = arith.mulf %165, %166 : vector<8x32xf32>
    %170 = arith.addf %168, %169 : vector<8x32xf32>
    %171 = math.tanh %170 : vector<8x32xf32>
    %172 = arith.mulf %167, %171 : vector<8x32xf32>
    %173 = arith.index_cast %151 : i32 to index
    %c0_48 = arith.constant 0 : index
    %174 = vector.load %arg7[%173, %c0_48] : memref<64x128xf32, #tpu.memory_space<vmem>>, vector<8x32xf32>
    tpu.vector_store %arg7[%173, %c0_48], %172 {strides = array<i32>} : memref<64x128xf32, #tpu.memory_space<vmem>>, vector<8x32xf32>,
    %c6_i32 = arith.constant 6 : i32
    %c8_i32_49 = arith.constant 8 : i32
    %175 = arith.muli %c6_i32, %c8_i32_49 : i32
    %176 = tpu.assume_multiple %175, 8 : i32
    %177 = arith.truncf %172 : vector<8x32xf32> to vector<8x32xbf16>
    %cst_50 = arith.constant dense<0.000000e+00> : vector<8x128xf32>
    %178 = tpu.matmul %177, %14, %cst_50 {dimension_numbers = #tpu.dot_dimension_numbers<[1], [0], [0], [1], [0, 0, 1, 1], [], []>} : vector<8x32xbf16>, vector<32x128xbf16>, vector<8x128xf32> -> vector<8x128xf32>
    %179 = arith.index_cast %176 : i32 to index
    %c0_51 = arith.constant 0 : index
    %180 = vector.load %arg10[%179, %c0_51] : memref<64x128xf32, #tpu.memory_space<vmem>>, vector<8x128xf32>
    %181 = arith.addf %178, %180 : vector<8x128xf32>
    %182 = arith.negf %181 : vector<8x128xf32>
    %183 = math.exp %182 : vector<8x128xf32>
    %cst_52 = arith.constant 1.000000e+00 : f32
    %184 = vector.broadcast %cst_52 : f32 to vector<8x128xf32>
    %185 = arith.addf %184, %183 : vector<8x128xf32>
    %186 = arith.divf %184, %185 : vector<8x128xf32>
    %187 = math.tanh %181 : vector<8x128xf32>
    %188 = arith.select %20, %187, %186 : vector<8x128xi1>, vector<8x128xf32>
    %189 = vector.extract_strided_slice %188 {offsets = [0, 0], sizes = [8, 32], strides = [1, 1]} : vector<8x128xf32> to vector<8x32xf32>
    %190 = vector.extract_strided_slice %188 {offsets = [0, 32], sizes = [8, 32], strides = [1, 1]} : vector<8x128xf32> to vector<8x32xf32>
    %191 = vector.extract_strided_slice %188 {offsets = [0, 64], sizes = [8, 32], strides = [1, 1]} : vector<8x128xf32> to vector<8x32xf32>
    %192 = vector.extract_strided_slice %188 {offsets = [0, 96], sizes = [8, 32], strides = [1, 1]} : vector<8x128xf32> to vector<8x32xf32>
    %193 = arith.mulf %189, %170 : vector<8x32xf32>
    %194 = arith.mulf %190, %191 : vector<8x32xf32>
    %195 = arith.addf %193, %194 : vector<8x32xf32>
    %196 = math.tanh %195 : vector<8x32xf32>
    %197 = arith.mulf %192, %196 : vector<8x32xf32>
    %198 = arith.index_cast %176 : i32 to index
    %c0_53 = arith.constant 0 : index
    %199 = vector.load %arg7[%198, %c0_53] : memref<64x128xf32, #tpu.memory_space<vmem>>, vector<8x32xf32>
    tpu.vector_store %arg7[%198, %c0_53], %197 {strides = array<i32>} : memref<64x128xf32, #tpu.memory_space<vmem>>, vector<8x32xf32>,
    %c7_i32 = arith.constant 7 : i32
    %c8_i32_54 = arith.constant 8 : i32
    %200 = arith.muli %c7_i32, %c8_i32_54 : i32
    %201 = tpu.assume_multiple %200, 8 : i32
    %202 = arith.truncf %197 : vector<8x32xf32> to vector<8x32xbf16>
    %cst_55 = arith.constant dense<0.000000e+00> : vector<8x128xf32>
    %203 = tpu.matmul %202, %14, %cst_55 {dimension_numbers = #tpu.dot_dimension_numbers<[1], [0], [0], [1], [0, 0, 1, 1], [], []>} : vector<8x32xbf16>, vector<32x128xbf16>, vector<8x128xf32> -> vector<8x128xf32>
    %204 = arith.index_cast %201 : i32 to index
    %c0_56 = arith.constant 0 : index
    %205 = vector.load %arg10[%204, %c0_56] : memref<64x128xf32, #tpu.memory_space<vmem>>, vector<8x128xf32>
    %206 = arith.addf %203, %205 : vector<8x128xf32>
    %207 = arith.negf %206 : vector<8x128xf32>
    %208 = math.exp %207 : vector<8x128xf32>
    %cst_57 = arith.constant 1.000000e+00 : f32
    %209 = vector.broadcast %cst_57 : f32 to vector<8x128xf32>
    %210 = arith.addf %209, %208 : vector<8x128xf32>
    %211 = arith.divf %209, %210 : vector<8x128xf32>
    %212 = math.tanh %206 : vector<8x128xf32>
    %213 = arith.select %20, %212, %211 : vector<8x128xi1>, vector<8x128xf32>
    %214 = vector.extract_strided_slice %213 {offsets = [0, 0], sizes = [8, 32], strides = [1, 1]} : vector<8x128xf32> to vector<8x32xf32>
    %215 = vector.extract_strided_slice %213 {offsets = [0, 32], sizes = [8, 32], strides = [1, 1]} : vector<8x128xf32> to vector<8x32xf32>
    %216 = vector.extract_strided_slice %213 {offsets = [0, 64], sizes = [8, 32], strides = [1, 1]} : vector<8x128xf32> to vector<8x32xf32>
    %217 = vector.extract_strided_slice %213 {offsets = [0, 96], sizes = [8, 32], strides = [1, 1]} : vector<8x128xf32> to vector<8x32xf32>
    %218 = arith.mulf %214, %195 : vector<8x32xf32>
    %219 = arith.mulf %215, %216 : vector<8x32xf32>
    %220 = arith.addf %218, %219 : vector<8x32xf32>
    %221 = math.tanh %220 : vector<8x32xf32>
    %222 = arith.mulf %217, %221 : vector<8x32xf32>
    %223 = arith.index_cast %201 : i32 to index
    %c0_58 = arith.constant 0 : index
    %224 = vector.load %arg7[%223, %c0_58] : memref<64x128xf32, #tpu.memory_space<vmem>>, vector<8x32xf32>
    tpu.vector_store %arg7[%223, %c0_58], %222 {strides = array<i32>} : memref<64x128xf32, #tpu.memory_space<vmem>>, vector<8x32xf32>,
    %c8_i32_59 = arith.constant 8 : i32
    %c0_60 = arith.constant 0 : index
    %c0_61 = arith.constant 0 : index
    %c0_62 = arith.constant 0 : index
    %225 = vector.load %arg8[%c0_60, %c0_61, %c0_62] : memref<1x8x32xf32, #tpu.memory_space<vmem>>, vector<1x8x32xf32>
    %226 = vector.shape_cast %225 : vector<1x8x32xf32> to vector<8x32xf32>
    %227 = vector.shape_cast %222 : vector<8x32xf32> to vector<1x8x32xf32>
    tpu.vector_store %arg8[%c0_60, %c0_61, %c0_62], %227 {strides = array<i32>} : memref<1x8x32xf32, #tpu.memory_space<vmem>>, vector<1x8x32xf32>,
    %c0_63 = arith.constant 0 : index
    %c0_64 = arith.constant 0 : index
    %c0_65 = arith.constant 0 : index
    %228 = vector.load %arg9[%c0_63, %c0_64, %c0_65] : memref<1x8x32xf32, #tpu.memory_space<vmem>>, vector<1x8x32xf32>
    %229 = vector.shape_cast %228 : vector<1x8x32xf32> to vector<8x32xf32>
    %230 = vector.shape_cast %220 : vector<8x32xf32> to vector<1x8x32xf32>
    tpu.vector_store %arg9[%c0_63, %c0_64, %c0_65], %230 {strides = array<i32>} : memref<1x8x32xf32, #tpu.memory_space<vmem>>, vector<1x8x32xf32>,
    return
  }
  func.func @transform_0(%arg0: i32) -> (i32, i32) {
    %c0_i32 = arith.constant 0 : i32
    %c0_i32_0 = arith.constant 0 : i32
    %c0_i32_1 = arith.constant 0 : i32
    return %c0_i32, %c0_i32_0 : i32, i32
  }
  func.func @transform_1(%arg0: i32) -> (i32, i32, i32) {
    %c0_i32 = arith.constant 0 : i32
    %c0_i32_0 = arith.constant 0 : i32
    %c0_i32_1 = arith.constant 0 : i32
    return %arg0, %c0_i32, %c0_i32_0 : i32, i32, i32
  }
  func.func @transform_2(%arg0: i32) -> (i32, i32, i32) {
    %c0_i32 = arith.constant 0 : i32
    %c0_i32_0 = arith.constant 0 : i32
    %c0_i32_1 = arith.constant 0 : i32
    return %arg0, %c0_i32, %c0_i32_0 : i32, i32, i32
  }
  func.func @transform_3(%arg0: i32) -> (i32, i32, i32) {
    %c0_i32 = arith.constant 0 : i32
    %c0_i32_0 = arith.constant 0 : i32
    %c0_i32_1 = arith.constant 0 : i32
    return %arg0, %c0_i32, %c0_i32_0 : i32, i32, i32
  }
  func.func @transform_4(%arg0: i32) -> (i32, i32, i32) {
    %c0_i32 = arith.constant 0 : i32
    %c0_i32_0 = arith.constant 0 : i32
    %c0_i32_1 = arith.constant 0 : i32
    return %arg0, %c0_i32, %c0_i32_0 : i32, i32, i32
  }
  func.func @transform_5(%arg0: i32) -> (i32, i32, i32) {
    %c0_i32 = arith.constant 0 : i32
    %c0_i32_0 = arith.constant 0 : i32
    %c0_i32_1 = arith.constant 0 : i32
    return %arg0, %c0_i32, %c0_i32_0 : i32, i32, i32
  }
  func.func @transform_6(%arg0: i32) -> (i32, i32) {
    %c0_i32 = arith.constant 0 : i32
    %c0_i32_0 = arith.constant 0 : i32
    %c0_i32_1 = arith.constant 0 : i32
    return %c0_i32, %c0_i32_0 : i32, i32
  }
  func.func @transform_7(%arg0: i32) -> (i32, i32, i32) {
    %c0_i32 = arith.constant 0 : i32
    %c0_i32_0 = arith.constant 0 : i32
    %c0_i32_1 = arith.constant 0 : i32
    return %arg0, %c0_i32, %c0_i32_0 : i32, i32, i32
  }
  func.func @transform_8(%arg0: i32) -> (i32, i32, i32) {
    %c0_i32 = arith.constant 0 : i32
    %c0_i32_0 = arith.constant 0 : i32
    %c0_i32_1 = arith.constant 0 : i32
    return %arg0, %c0_i32, %c0_i32_0 : i32, i32, i32
  }
}

</mosaic_0001>

<llo_original>
// kernel: lstm_forward.1
$region0: #{lstm_forward.1}
  #allocation0 [shape = 'u32[]', space=smem, size = 0x4, offset = 0x4, fixed_abs, tag = 'smem constant byte address 0x4 - core index']
  #allocation1 [shape = 'u32[72,128]{1,0:T(1,128)}', space=vmem, size = 0x9000, scoped, tag = 'internal scratch']
  #allocation2 [shape = 'f32[64,128]{1,0:T(8,128)}', space=vmem, size = 0x8000, scoped, tag = 'scratch operand']
  %s0 = inlined_call_operand.vmem [shape: f32[64,128], index: 0, kind: input, shape index: {}]
  %s1 = inlined_call_operand.vmem [shape: f32[2,8,32], index: 1, kind: input, shape index: {}, may-alias: {1,7}]
  %s2 = inlined_call_operand.vmem [shape: f32[2,8,32], index: 2, kind: input, shape index: {}, may-alias: {2,8}]
  %s3 = inlined_call_operand.vmem [shape: bf16[2,128,128], index: 3, kind: input, shape index: {}]
  %s4 = inlined_call_operand.vmem [shape: bf16[2,32,128], index: 4, kind: input, shape index: {}]
  %s5 = inlined_call_operand.vmem [shape: f32[2,1,128], index: 5, kind: input, shape index: {}]
  %s6 = inlined_call_operand.vmem [shape: f32[64,128], index: 6, kind: output, shape index: {0}]
  %s7 = inlined_call_operand.vmem [shape: f32[2,8,32], index: 7, kind: output, shape index: {1}, may-alias: {1,7}]
  %s8 = inlined_call_operand.vmem [shape: f32[2,8,32], index: 8, kind: output, shape index: {2}, may-alias: {2,8}]
  %9 = xla_tuple %s6, %s7, %s8
  %s10 = sld [smem:[#allocation0]]
  $region77: #{lstm_forward.1} parent=0
    _
  %s12 = ssub.s32 1, %s10
  %s13 = scalar_select 0, %s12, %s10
  loop: start=0, step=1, limit=4
  $region2: #{lstm_forward.1} parent=0 // loop_pre_header
    _
  $region3: #{lstm_forward.1} parent=0 // loop_header
    %s15 = sphi 0, %s19
    %p16 = scmp.ge.s32.totalorder %s15, 4
    %s23 = sphi 0, %s23
    %s25 = sphi 0, %s23
    %s26 = sphi 0, %s25
    %s40 = sphi 0, %s26
    %s46 = sphi 0, %s48
    %s49 = sphi 0, %s46
    %s50 = sphi 0, %s49
    %s66 = sphi 0, %s50
    %s72 = sphi 0, %s74
    %s75 = sphi 0, %s72
    %s76 = sphi 0, %s75
    %s92 = sphi 0, %s76
    %s98 = sphi 0, %s100
    %s101 = sphi 0, %s98
    %s102 = sphi 0, %s101
    %s118 = sphi 0, %s102
    %s124 = sphi 0, %s126
    %s127 = sphi 0, %s124
    %s128 = sphi 0, %s127
    %s144 = sphi 0, %s128
    %s150 = sphi 0, %s152
    %s153 = sphi 0, %s150
    %s154 = sphi 0, %s153
    %s170 = sphi 0, %s154
    %s174 = sphi 0, %s174
    %s176 = sphi 0, %s174
    %s177 = sphi 0, %s176
    %s191 = sphi 0, %s177
    %s197 = sphi 0, %s199
    %s200 = sphi 0, %s197
    %s201 = sphi 0, %s200
    %s217 = sphi 0, %s201
    %s223 = sphi 0, %s225
    %s226 = sphi 0, %s223
    %s227 = sphi 0, %s226
    %s243 = sphi 0, %s227
  $region4: #{lstm_forward.1} parent=0 // loop_header_branch
    %18 = sbr.rel (%p16) target = $region8
  $region5: #{lstm_forward.1} parent=0 // loop_body
    %s20 = ssub.s32 %s15, 1
    %s21 = ssub.s32 %s15, 2
    %s22 = sadd.s32 %s15, 1
    %s24 = sadd.s32 %s23, 1
    %p27 = scmp.eq.s32.totalorder %s15, 1
    %p28 = scmp.ne.s32.totalorder %s23, %s25
    %p29 = scmp.eq.s32.totalorder %s15, 0
    %p30 = por %p28, %p29
    %p31 = scmp.ne.s32.totalorder %s23, %s25
    %p32 = scmp.eq.s32.totalorder %s20, 1
    %p33 = por %p31, %p32
    %p34 = scmp.ne.s32.totalorder %s25, %s26
    %p35 = scmp.eq.s32.totalorder %s20, 0
    %p36 = por %p34, %p35
    %p37 = scmp.ne.s32.totalorder %s25, %s26
    %p38 = scmp.eq.s32.totalorder %s21, 1
    %p39 = por %p37, %p38
    %p41 = scmp.ne.s32.totalorder %s26, %s40
    %p42 = scmp.eq.s32.totalorder %s21, 0
    %p43 = por %p41, %p42
    %s44 = ssub.s32 %s15, %s22
    %p45 = scmp.eq.s32.totalorder %s44, 0
    %s47 = sadd.s32 %s46, 1
    %s48 = scalar_select %p45, %s46, %s47
    %p51 = pneg %p45
    %p52 = scmp.eq.s32.totalorder %s15, 1
    %p53 = por %p51, %p52
    %p54 = scmp.ne.s32.totalorder %s46, %s49
    %p55 = scmp.eq.s32.totalorder %s15, 0
    %p56 = por %p54, %p55
    %p57 = scmp.ne.s32.totalorder %s46, %s49
    %p58 = scmp.eq.s32.totalorder %s20, 1
    %p59 = por %p57, %p58
    %p60 = scmp.ne.s32.totalorder %s49, %s50
    %p61 = scmp.eq.s32.totalorder %s20, 0
    %p62 = por %p60, %p61
    %p63 = scmp.ne.s32.totalorder %s49, %s50
    %p64 = scmp.eq.s32.totalorder %s21, 1
    %p65 = por %p63, %p64
    %p67 = scmp.ne.s32.totalorder %s50, %s66
    %p68 = scmp.eq.s32.totalorder %s21, 0
    %p69 = por %p67, %p68
    %s70 = ssub.s32 %s15, %s22
    %p71 = scmp.eq.s32.totalorder %s70, 0
    %s73 = sadd.s32 %s72, 1
    %s74 = scalar_select %p71, %s72, %s73
    %p77 = pneg %p71
    %p78 = scmp.eq.s32.totalorder %s15, 1
    %p79 = por %p77, %p78
    %p80 = scmp.ne.s32.totalorder %s72, %s75
    %p81 = scmp.eq.s32.totalorder %s15, 0
    %p82 = por %p80, %p81
    %p83 = scmp.ne.s32.totalorder %s72, %s75
    %p84 = scmp.eq.s32.totalorder %s20, 1
    %p85 = por %p83, %p84
    %p86 = scmp.ne.s32.totalorder %s75, %s76
    %p87 = scmp.eq.s32.totalorder %s20, 0
    %p88 = por %p86, %p87
    %p89 = scmp.ne.s32.totalorder %s75, %s76
    %p90 = scmp.eq.s32.totalorder %s21, 1
    %p91 = por %p89, %p90
    %p93 = scmp.ne.s32.totalorder %s76, %s92
    %p94 = scmp.eq.s32.totalorder %s21, 0
    %p95 = por %p93, %p94
    %s96 = ssub.s32 %s15, %s22
    %p97 = scmp.eq.s32.totalorder %s96, 0
    %s99 = sadd.s32 %s98, 1
    %s100 = scalar_select %p97, %s98, %s99
    %p103 = pneg %p97
    %p104 = scmp.eq.s32.totalorder %s15, 1
    %p105 = por %p103, %p104
    %p106 = scmp.ne.s32.totalorder %s98, %s101
    %p107 = scmp.eq.s32.totalorder %s15, 0
    %p108 = por %p106, %p107
    %p109 = scmp.ne.s32.totalorder %s98, %s101
    %p110 = scmp.eq.s32.totalorder %s20, 1
    %p111 = por %p109, %p110
    %p112 = scmp.ne.s32.totalorder %s101, %s102
    %p113 = scmp.eq.s32.totalorder %s20, 0
    %p114 = por %p112, %p113
    %p115 = scmp.ne.s32.totalorder %s101, %s102
    %p116 = scmp.eq.s32.totalorder %s21, 1
    %p117 = por %p115, %p116
    %p119 = scmp.ne.s32.totalorder %s102, %s118
    %p120 = scmp.eq.s32.totalorder %s21, 0
    %p121 = por %p119, %p120
    %s122 = ssub.s32 %s15, %s22
    %p123 = scmp.eq.s32.totalorder %s122, 0
    %s125 = sadd.s32 %s124, 1
    %s126 = scalar_select %p123, %s124, %s125
    %p129 = pneg %p123
    %p130 = scmp.eq.s32.totalorder %s15, 1
    %p131 = por %p129, %p130
    %p132 = scmp.ne.s32.totalorder %s124, %s127
    %p133 = scmp.eq.s32.totalorder %s15, 0
    %p134 = por %p132, %p133
    %p135 = scmp.ne.s32.totalorder %s124, %s127
    %p136 = scmp.eq.s32.totalorder %s20, 1
    %p137 = por %p135, %p136
    %p138 = scmp.ne.s32.totalorder %s127, %s128
    %p139 = scmp.eq.s32.totalorder %s20, 0
    %p140 = por %p138, %p139
    %p141 = scmp.ne.s32.totalorder %s127, %s128
    %p142 = scmp.eq.s32.totalorder %s21, 1
    %p143 = por %p141, %p142
    %p145 = scmp.ne.s32.totalorder %s128, %s144
    %p146 = scmp.eq.s32.totalorder %s21, 0
    %p147 = por %p145, %p146
    %s148 = ssub.s32 %s15, %s22
    %p149 = scmp.eq.s32.totalorder %s148, 0
    %s151 = sadd.s32 %s150, 1
    %s152 = scalar_select %p149, %s150, %s151
    %p155 = pneg %p149
    %p156 = scmp.eq.s32.totalorder %s15, 1
    %p157 = por %p155, %p156
    %p158 = scmp.ne.s32.totalorder %s150, %s153
    %p159 = scmp.eq.s32.totalorder %s15, 0
    %p160 = por %p158, %p159
    %p161 = scmp.ne.s32.totalorder %s150, %s153
    %p162 = scmp.eq.s32.totalorder %s20, 1
    %p163 = por %p161, %p162
    %p164 = scmp.ne.s32.totalorder %s153, %s154
    %p165 = scmp.eq.s32.totalorder %s20, 0
    %p166 = por %p164, %p165
    %p167 = scmp.ne.s32.totalorder %s153, %s154
    %p168 = scmp.eq.s32.totalorder %s21, 1
    %p169 = por %p167, %p168
    %p171 = scmp.ne.s32.totalorder %s154, %s170
    %p172 = scmp.eq.s32.totalorder %s21, 0
    %p173 = por %p171, %p172
    %s175 = sadd.s32 %s174, 1
    %p178 = scmp.eq.s32.totalorder %s15, 1
    %p179 = scmp.ne.s32.totalorder %s174, %s176
    %p180 = scmp.eq.s32.totalorder %s15, 0
    %p181 = por %p179, %p180
    %p182 = scmp.ne.s32.totalorder %s174, %s176
    %p183 = scmp.eq.s32.totalorder %s20, 1
    %p184 = por %p182, %p183
    %p185 = scmp.ne.s32.totalorder %s176, %s177
    %p186 = scmp.eq.s32.totalorder %s20, 0
    %p187 = por %p185, %p186
    %p188 = scmp.ne.s32.totalorder %s176, %s177
    %p189 = scmp.eq.s32.totalorder %s21, 1
    %p190 = por %p188, %p189
    %p192 = scmp.ne.s32.totalorder %s177, %s191
    %p193 = scmp.eq.s32.totalorder %s21, 0
    %p194 = por %p192, %p193
    %s195 = ssub.s32 %s15, %s22
    %p196 = scmp.eq.s32.totalorder %s195, 0
    %s198 = sadd.s32 %s197, 1
    %s199 = scalar_select %p196, %s197, %s198
    %p202 = pneg %p196
    %p203 = scmp.eq.s32.totalorder %s15, 1
    %p204 = por %p202, %p203
    %p205 = scmp.ne.s32.totalorder %s197, %s200
    %p206 = scmp.eq.s32.totalorder %s15, 0
    %p207 = por %p205, %p206
    %p208 = scmp.ne.s32.totalorder %s197, %s200
    %p209 = scmp.eq.s32.totalorder %s20, 1
    %p210 = por %p208, %p209
    %p211 = scmp.ne.s32.totalorder %s200, %s201
    %p212 = scmp.eq.s32.totalorder %s20, 0
    %p213 = por %p211, %p212
    %p214 = scmp.ne.s32.totalorder %s200, %s201
    %p215 = scmp.eq.s32.totalorder %s21, 1
    %p216 = por %p214, %p215
    %p218 = scmp.ne.s32.totalorder %s201, %s217
    %p219 = scmp.eq.s32.totalorder %s21, 0
    %p220 = por %p218, %p219
    %s221 = ssub.s32 %s15, %s22
    %p222 = scmp.eq.s32.totalorder %s221, 0
    %s224 = sadd.s32 %s223, 1
    %s225 = scalar_select %p222, %s223, %s224
    %p228 = pneg %p222
    %p229 = scmp.eq.s32.totalorder %s15, 1
    %p230 = por %p228, %p229
    %p231 = scmp.ne.s32.totalorder %s223, %s226
    %p232 = scmp.eq.s32.totalorder %s15, 0
    %p233 = por %p231, %p232
    %p234 = scmp.ne.s32.totalorder %s223, %s226
    %p235 = scmp.eq.s32.totalorder %s20, 1
    %p236 = por %p234, %p235
    %p237 = scmp.ne.s32.totalorder %s226, %s227
    %p238 = scmp.eq.s32.totalorder %s20, 0
    %p239 = por %p237, %p238
    %p240 = scmp.ne.s32.totalorder %s226, %s227
    %p241 = scmp.eq.s32.totalorder %s21, 1
    %p242 = por %p240, %p241
    %p244 = scmp.ne.s32.totalorder %s227, %s243
    %p245 = scmp.eq.s32.totalorder %s21, 0
    %p246 = por %p244, %p245
    %p247 = scmp.le.s32.totalorder 1, %s15
    %p248 = scmp.lt.s32.totalorder %s15, 3
    %p249 = pnand %p247, %p248
    %p250 = pneg %p249
    // Predicated region
    $region9: #{lstm_forward.1} parent=5 // pred_check
      _
    $region10: #{lstm_forward.1} parent=5 // pred_check_branch
      %252 = sbr.rel (%p249) target = $region12
    $region11: #{lstm_forward.1} parent=5 // pred_region
      %s253 = ssub.s32 %s15, 1
      // Predicated region
      $region13: #{lstm_forward.1} parent=11 // pred_check
        %p254 = pneg %p36
      $region14: #{lstm_forward.1} parent=11 // pred_check_branch
        %256 = sbr.rel (%p254) target = $region16
      $region15: #{lstm_forward.1} parent=11 // pred_region
        _
      $region16: #{lstm_forward.1} parent=11 // pred_fallthru
        _
    $region12: #{lstm_forward.1} parent=5 // pred_fallthru
      _
    %p257 = scmp.lt.s32.totalorder %s15, 2
    // Predicated region
    $region17: #{lstm_forward.1} parent=5 // pred_check
      %p258 = pneg %p257
    $region18: #{lstm_forward.1} parent=5 // pred_check_branch
      %260 = sbr.rel (%p258) target = $region20
    $region19: #{lstm_forward.1} parent=5 // pred_region
      // Predicated region
      $region21: #{lstm_forward.1} parent=19 // pred_check
        %p261 = pneg %p56
      $region22: #{lstm_forward.1} parent=19 // pred_check_branch
        %263 = sbr.rel (%p261) target = $region24
      $region23: #{lstm_forward.1} parent=19 // pred_region
        %p264 = scmp.lt.s32.totalorder %s15, 1
        %s265 = scalar_select %p264, %s15, 1
        %s266 = smul.addr %s265, 8
        %s267 = scalar_lea.vmem %s1, %s266
      $region24: #{lstm_forward.1} parent=19 // pred_fallthru
        _
      // Predicated region
      $region25: #{lstm_forward.1} parent=19 // pred_check
        %p268 = pneg %p82
      $region26: #{lstm_forward.1} parent=19 // pred_check_branch
        %270 = sbr.rel (%p268) target = $region28
      $region27: #{lstm_forward.1} parent=19 // pred_region
        %p271 = scmp.lt.s32.totalorder %s15, 1
        %s272 = scalar_select %p271, %s15, 1
        %s273 = smul.addr %s272, 8
        %s274 = scalar_lea.vmem %s2, %s273
      $region28: #{lstm_forward.1} parent=19 // pred_fallthru
        _
      // Predicated region
      $region29: #{lstm_forward.1} parent=19 // pred_check
        %p275 = pneg %p108
      $region30: #{lstm_forward.1} parent=19 // pred_check_branch
        %277 = sbr.rel (%p275) target = $region32
      $region31: #{lstm_forward.1} parent=19 // pred_region
        %p278 = scmp.lt.s32.totalorder %s15, 1
        %s279 = scalar_select %p278, %s15, 1
        %s280 = smul.addr %s279, 16
        %s281 = smul.addr %s280, 4
        %s282 = scalar_lea.vmem %s3, %s281
      $region32: #{lstm_forward.1} parent=19 // pred_fallthru
        _
      // Predicated region
      $region33: #{lstm_forward.1} parent=19 // pred_check
        %p283 = pneg %p134
      $region34: #{lstm_forward.1} parent=19 // pred_check_branch
        %285 = sbr.rel (%p283) target = $region36
      $region35: #{lstm_forward.1} parent=19 // pred_region
        %p286 = scmp.lt.s32.totalorder %s15, 1
        %s287 = scalar_select %p286, %s15, 1
        %s288 = smul.addr %s287, 4
        %s289 = smul.addr %s288, 4
        %s290 = scalar_lea.vmem %s4, %s289
      $region36: #{lstm_forward.1} parent=19 // pred_fallthru
        _
      // Predicated region
      $region37: #{lstm_forward.1} parent=19 // pred_check
        %p291 = pneg %p160
      $region38: #{lstm_forward.1} parent=19 // pred_check_branch
        %293 = sbr.rel (%p291) target = $region40
      $region39: #{lstm_forward.1} parent=19 // pred_region
        %p294 = scmp.lt.s32.totalorder %s15, 1
        %s295 = scalar_select %p294, %s15, 1
        %s296 = scalar_lea.vmem %s5, %s295
      $region40: #{lstm_forward.1} parent=19 // pred_fallthru
        _
    $region20: #{lstm_forward.1} parent=5 // pred_fallthru
      _
    %p297 = scmp.le.s32.totalorder 1, %s15
    %p298 = scmp.lt.s32.totalorder %s15, 3
    %p299 = pnand %p297, %p298
    %p300 = pneg %p299
    // Predicated region
    $region41: #{lstm_forward.1} parent=5 // pred_check
      _
    $region42: #{lstm_forward.1} parent=5 // pred_check_branch
      %302 = sbr.rel (%p299) target = $region44
    $region43: #{lstm_forward.1} parent=5 // pred_region
      %s303 = ssub.s32 %s15, 1
      %p304 = pneg %p36
      %p305 = pneg %p33
      %p306 = scmp.lt.s32.totalorder %s20, 1
      %s307 = scalar_select %p306, %s20, 1
      %s308 = smul.addr %s307, 8
      %s309 = scalar_lea.vmem %s1, %s308
      %p310 = pneg %p62
      %p311 = pneg %p59
      %p312 = scmp.lt.s32.totalorder %s20, 1
      %s313 = scalar_select %p312, %s20, 1
      %s314 = smul.addr %s313, 8
      %s315 = scalar_lea.vmem %s2, %s314
      %p316 = pneg %p88
      %p317 = pneg %p85
      %p318 = scmp.lt.s32.totalorder %s20, 1
      %s319 = scalar_select %p318, %s20, 1
      %s320 = smul.addr %s319, 16
      %s321 = smul.addr %s320, 4
      %s322 = scalar_lea.vmem %s3, %s321
      %p323 = pneg %p114
      %p324 = pneg %p111
      %p325 = scmp.lt.s32.totalorder %s20, 1
      %s326 = scalar_select %p325, %s20, 1
      %s327 = smul.addr %s326, 4
      %s328 = smul.addr %s327, 4
      %s329 = scalar_lea.vmem %s4, %s328
      %p330 = pneg %p140
      %p331 = pneg %p137
      %p332 = scmp.lt.s32.totalorder %s20, 1
      %s333 = scalar_select %p332, %s20, 1
      %s334 = scalar_lea.vmem %s5, %s333
      %p335 = pneg %p166
      %p336 = pneg %p163
      %p337 = pneg %p187
      %p338 = pneg %p184
      %p339 = pneg %p213
      %p340 = pneg %p210
      %p341 = scmp.lt.s32.totalorder %s20, 1
      %s342 = scalar_select %p341, %s20, 1
      %s343 = smul.addr %s342, 8
      %s344 = scalar_lea.vmem %s7, %s343
      %p345 = pneg %p239
      %p346 = pneg %p236
      %p347 = scmp.lt.s32.totalorder %s20, 1
      %s348 = scalar_select %p347, %s20, 1
      %s349 = smul.addr %s348, 8
      %s350 = scalar_lea.vmem %s8, %s349
      %p351 = scmp.lt.s32.totalorder %s20, 1
      %s352 = scalar_select %p351, %s20, 1
      %s353 = smul.addr %s352, 8
      %s354 = scalar_lea.vmem %s1, %s353
      %p355 = scmp.lt.s32.totalorder %s20, 1
      %s356 = scalar_select %p355, %s20, 1
      %s357 = smul.addr %s356, 8
      %s358 = scalar_lea.vmem %s2, %s357
      %p359 = scmp.lt.s32.totalorder %s20, 1
      %s360 = scalar_select %p359, %s20, 1
      %s361 = smul.addr %s360, 16
      %s362 = smul.addr %s361, 4
      %s363 = scalar_lea.vmem %s3, %s362
      %p364 = scmp.lt.s32.totalorder %s20, 1
      %s365 = scalar_select %p364, %s20, 1
      %s366 = smul.addr %s365, 4
      %s367 = smul.addr %s366, 4
      %s368 = scalar_lea.vmem %s4, %s367
      %p369 = scmp.lt.s32.totalorder %s20, 1
      %s370 = scalar_select %p369, %s20, 1
      %s371 = scalar_lea.vmem %s5, %s370
      %p372 = scmp.lt.s32.totalorder %s20, 1
      %s373 = scalar_select %p372, %s20, 1
      %s374 = smul.addr %s373, 8
      %s375 = scalar_lea.vmem %s7, %s374
      %p376 = scmp.lt.s32.totalorder %s20, 1
      %s377 = scalar_select %p376, %s20, 1
      %s378 = smul.addr %s377, 8
      %s379 = scalar_lea.vmem %s8, %s378
      %p381 = scmp.eq.s32.totalorder %s20, 0
      // Predicated region
      $region45: #{lstm_forward.1} parent=43 // pred_check
        %p382 = pneg %p381
      $region46: #{lstm_forward.1} parent=43 // pred_check_branch
        %384 = sbr.rel (%p382) target = $region48
      $region47: #{lstm_forward.1} parent=43 // pred_region
        %v385 = vld [vmem:[%s0] sm:$0xff]
        %v386 = vld [vmem:[%s0 + $0x8] sm:$0xff]
        %v387 = vld [vmem:[%s0 + $0x10] sm:$0xff]
        %v388 = vld [vmem:[%s0 + $0x18] sm:$0xff]
        %v389 = vld [vmem:[%s0 + $0x20] sm:$0xff]
        %v390 = vld [vmem:[%s0 + $0x28] sm:$0xff]
        %v391 = vld [vmem:[%s0 + $0x30] sm:$0xff]
        %v392 = vld [vmem:[%s0 + $0x38] sm:$0xff]
        %393 = vst [vmem:[%s6] sm:$0xff] %v385
        %394 = vst [vmem:[%s6 + $0x8] sm:$0xff] %v386
        %395 = vst [vmem:[%s6 + $0x10] sm:$0xff] %v387
        %396 = vst [vmem:[%s6 + $0x18] sm:$0xff] %v388
        %397 = vst [vmem:[%s6 + $0x20] sm:$0xff] %v389
        %398 = vst [vmem:[%s6 + $0x28] sm:$0xff] %v390
        %399 = vst [vmem:[%s6 + $0x30] sm:$0xff] %v391
        %400 = vst [vmem:[%s6 + $0x38] sm:$0xff] %v392
      $region48: #{lstm_forward.1} parent=43 // pred_fallthru
        _
      %v401 = vld [vmem:[%s6] sm:$0xff]
      %v402 = vld [vmem:[%s6 + $0x8] sm:$0xff]
      %v403 = vld [vmem:[%s6 + $0x10] sm:$0xff]
      %v404 = vld [vmem:[%s6 + $0x18] sm:$0xff]
      %v405 = vld [vmem:[%s6 + $0x20] sm:$0xff]
      %v406 = vld [vmem:[%s6 + $0x28] sm:$0xff]
      %v407 = vld [vmem:[%s6 + $0x30] sm:$0xff]
      %v408 = vld [vmem:[%s6 + $0x38] sm:$0xff]
      %v409 = vpack.c.bf16 %v402, %v401
      %v410 = vpack.c.bf16 %v404, %v403
      %v411 = vpack.c.bf16 %v406, %v405
      %v412 = vpack.c.bf16 %v408, %v407
      %v413 = vld [vmem:[%s363] sm:$0xf]
      %v414 = vld [vmem:[%s363 + $0x4] sm:$0xf]
      %v415 = vld [vmem:[%s363 + $0x8] sm:$0xf]
      %v416 = vld [vmem:[%s363 + $0xc] sm:$0xf]
      %v417 = vld [vmem:[%s363 + $0x10] sm:$0xf]
      %v418 = vld [vmem:[%s363 + $0x14] sm:$0xf]
      %v419 = vld [vmem:[%s363 + $0x18] sm:$0xf]
      %v420 = vld [vmem:[%s363 + $0x1c] sm:$0xf]
      %v421 = vld [vmem:[%s363 + $0x20] sm:$0xf]
      %v422 = vld [vmem:[%s363 + $0x24] sm:$0xf]
      %v423 = vld [vmem:[%s363 + $0x28] sm:$0xf]
      %v424 = vld [vmem:[%s363 + $0x2c] sm:$0xf]
      %v425 = vld [vmem:[%s363 + $0x30] sm:$0xf]
      %v426 = vld [vmem:[%s363 + $0x34] sm:$0xf]
      %v427 = vld [vmem:[%s363 + $0x38] sm:$0xf]
      %v428 = vld [vmem:[%s363 + $0x3c] sm:$0xf]
      %v429 = vld [vmem:[%s371] sm:$0x1]
      %v431 = vperm.slane %v429, 0
      %v449 = vunpack.c.l.b16 %v413
      %v450 = vunpack.c.l.b16 %v414
      %v451 = vunpack.c.l.b16 %v415
      %v452 = vunpack.c.l.b16 %v416
      %v453 = vunpack.c.l.b16 %v417
      %v454 = vunpack.c.l.b16 %v418
      %v455 = vunpack.c.l.b16 %v419
      %v456 = vunpack.c.l.b16 %v420
      %v457 = vunpack.c.l.b16 %v421
      %v458 = vunpack.c.l.b16 %v422
      %v459 = vunpack.c.l.b16 %v423
      %v460 = vunpack.c.l.b16 %v424
      %v461 = vunpack.c.l.b16 %v425
      %v462 = vunpack.c.l.b16 %v426
      %v463 = vunpack.c.l.b16 %v427
      %v464 = vunpack.c.l.b16 %v428
      %v465 = vpack.c.b16 %v450, %v449
      %v466 = vpack.c.b16 %v452, %v451
      %v467 = vpack.c.b16 %v454, %v453
      %v468 = vpack.c.b16 %v456, %v455
      %v469 = vpack.c.b16 %v458, %v457
      %v470 = vpack.c.b16 %v460, %v459
      %v471 = vpack.c.b16 %v462, %v461
      %v472 = vpack.c.b16 %v464, %v463
      %481 = vmatpush.bf16.msra.mxu0 %v472
      %482 = vmatpush.bf16.msra.mxu0 %v471
      %483 = vmatpush.bf16.msra.mxu0 %v470
      %484 = vmatpush.bf16.msra.mxu0 %v469
      %485 = vmatpush.bf16.msra.mxu0 %v468
      %486 = vmatpush.bf16.msra.mxu0 %v467
      %487 = vmatpush.bf16.msra.mxu0 %v466
      %488 = vmatpush.bf16.msra.mxu0 %v465
      %489 = vmatmul.bf16.gmra.mxu0 %v409
      %v490 = vpop.f32.mrf.mxu0
      %v491 = vadd.f32 %v431, %v490
      %v492 = vpop.f32.mrf.mxu0
      %v493 = vadd.f32 %v431, %v492
      %494 = vmatmul.bf16.gmra.mxu0 %v410
      %v495 = vpop.f32.mrf.mxu0
      %v496 = vadd.f32 %v431, %v495
      %v497 = vpop.f32.mrf.mxu0
      %v498 = vadd.f32 %v431, %v497
      %499 = vmatmul.bf16.gmra.mxu0 %v411
      %v500 = vpop.f32.mrf.mxu0
      %v501 = vadd.f32 %v431, %v500
      %v502 = vpop.f32.mrf.mxu0
      %v503 = vadd.f32 %v431, %v502
      %504 = vmatmul.bf16.gmra.mxu0 %v412
      %v505 = vpop.f32.mrf.mxu0
      %v506 = vadd.f32 %v431, %v505
      %v507 = vpop.f32.mrf.mxu0
      %v508 = vadd.f32 %v431, %v507
      %509 = vdwg.mxu0
      %510 = vst [vmem:[#allocation2] sm:$0xff] %v491
      %511 = vst [vmem:[#allocation2 + $0x8] sm:$0xff] %v493
      %512 = vst [vmem:[#allocation2 + $0x10] sm:$0xff] %v496
      %513 = vst [vmem:[#allocation2 + $0x18] sm:$0xff] %v498
      %514 = vst [vmem:[#allocation2 + $0x20] sm:$0xff] %v501
      %515 = vst [vmem:[#allocation2 + $0x28] sm:$0xff] %v503
      %516 = vst [vmem:[#allocation2 + $0x30] sm:$0xff] %v506
      %517 = vst [vmem:[#allocation2 + $0x38] sm:$0xff] %v508
      %v518 = vld [vmem:[%s368] sm:$0xf]
      %v519 = vld [vmem:[%s368 + $0x4] sm:$0xf]
      %v520 = vld [vmem:[%s368 + $0x8] sm:$0xf]
      %v521 = vld [vmem:[%s368 + $0xc] sm:$0xf]
      %v522 = vlaneseq
      %v523 = vand.u32 %v522, 127
      %vm524 = vcmp.ge.s32.totalorder %v523, 64
      %vm525 = vcmp.lt.s32.totalorder %v523, 96
      %vm526 = vmand %vm524, %vm525
      %v527 = vld [vmem:[%s354] sm:$0xff]
      %v528 = vld [vmem:[%s358] sm:$0xff]
      %v529 = vpack.c.bf16 %v527, %v527
      %v530 = vld [vmem:[#allocation2] sm:$0xff]
      %v535 = vunpack.c.l.b16 %v518
      %v536 = vunpack.c.l.b16 %v519
      %v537 = vunpack.c.l.b16 %v520
      %v538 = vunpack.c.l.b16 %v521
      %v539 = vpack.c.b16 %v536, %v535
      %v540 = vpack.c.b16 %v538, %v537
      %vm543 = vcmask 261120
      %v545 = vsel %vm543, %v529, 0
      %547 = vmatpush.bf16.msra.mxu0 0
      %548 = vmatpush.bf16.msra.mxu0 0
      %549 = vmatpush.bf16.msra.mxu0 0
      %550 = vmatpush.bf16.msra.mxu0 0
      %551 = vmatpush.bf16.msra.mxu0 0
      %552 = vmatpush.bf16.msra.mxu0 0
      %553 = vmatpush.bf16.msra.mxu0 %v540
      %554 = vmatpush.bf16.msra.mxu0 %v539
      %555 = vmatmul.bf16.gmra.mxu0 %v545
      %v556 = vpop.f32.mrf.mxu0
      %v557 = vadd.f32 %v530, %v556
      %v558 = vpop.f32.mrf.mxu0
      %559 = vdwg.mxu0
      %v560 = vxor.u32 %v557, 2147483648
      %v561 = vmul.f32 %v560, 1.442695
      %v562 = vpow.pop %v561
      %v563 = vadd.f32 %v562, 1.0
      %v564 = vrcp.pop %v563
      %v565 = vmul.f32 %v563, %v564
      %v566 = vsub.f32 1.0, %v565
      %v567 = vmul.f32 %v564, %v566
      %v568 = vadd.f32 %v564, %v567
      %vm569 = vweird.f32 %v563
      %vm570 = vweird.f32 %v564
      %vm571 = vmor %vm569, %vm570
      %v572 = vsel %vm571, %v564, %v568
      %v573 = vand.u32 2147483647, %v563
      %vm574 = vcmp.eq.f32.partialorder %v573, 8.507059e+37
      %v575 = vand.u32 %v563, 2147483648
      %v576 = vor.u32 1.1754944e-38, %v575
      %v577 = vsel %vm574, %v576, %v572
      %v578 = vmul.f32 1.0, %v577
      %v579 = vtanh.pop %v557
      %v580 = vsel %vm526, %v579, %v578
      %v581 = vmul.f32 %v580, %v528
      %583 = vrot.lane.b32.xlu0 %v580, 96
      %v584 = vpop.permute.xlu0 %583
      %v586 = vmul.f32 %v580, %v584
      %588 = vrot.lane.b32.xlu0 %v586, 96
      %v589 = vpop.permute.xlu0 %588
      %v591 = vadd.f32 %v581, %v589
      %v592 = vtanh.pop %v591
      %594 = vrot.lane.b32.xlu0 %v592, 96
      %v595 = vpop.permute.xlu0 %594
      %v597 = vmul.f32 %v580, %v595
      %599 = vrot.lane.b32.xlu0 %v597, 32
      %v600 = vpop.permute.xlu0 %599
      %602 = vst.msk [vmem:[%s6] sm:$0xff] %vm543, %v600
      %v603 = vpack.c.bf16 %v597, %v597
      %s604 = scalar_lea.vmem [#allocation2], 8
      %v605 = vld [vmem:[%s604] sm:$0xff]
      %607 = vrot.lane.b32.xlu0 %v603, 32
      %v608 = vpop.permute.xlu0 %607
      %v610 = vsel %vm543, %v608, 0
      %612 = vmatpush.bf16.msra.mxu0 0
      %613 = vmatpush.bf16.msra.mxu0 0
      %614 = vmatpush.bf16.msra.mxu0 0
      %615 = vmatpush.bf16.msra.mxu0 0
      %616 = vmatpush.bf16.msra.mxu0 0
      %617 = vmatpush.bf16.msra.mxu0 0
      %618 = vmatpush.bf16.msra.mxu0 %v540
      %619 = vmatpush.bf16.msra.mxu0 %v539
      %620 = vmatmul.bf16.gmra.mxu0 %v610
      %v621 = vpop.f32.mrf.mxu0
      %v622 = vadd.f32 %v605, %v621
      %v623 = vpop.f32.mrf.mxu0
      %624 = vdwg.mxu0
      %v625 = vxor.u32 %v622, 2147483648
      %v626 = vmul.f32 %v625, 1.442695
      %v627 = vpow.pop %v626
      %v628 = vadd.f32 %v627, 1.0
      %v629 = vrcp.pop %v628
      %v630 = vmul.f32 %v628, %v629
      %v631 = vsub.f32 1.0, %v630
      %v632 = vmul.f32 %v629, %v631
      %v633 = vadd.f32 %v629, %v632
      %vm634 = vweird.f32 %v628
      %vm635 = vweird.f32 %v629
      %vm636 = vmor %vm634, %vm635
      %v637 = vsel %vm636, %v629, %v633
      %v638 = vand.u32 2147483647, %v628
      %vm639 = vcmp.eq.f32.partialorder %v638, 8.507059e+37
      %v640 = vand.u32 %v628, 2147483648
      %v641 = vor.u32 1.1754944e-38, %v640
      %v642 = vsel %vm639, %v641, %v637
      %v643 = vmul.f32 1.0, %v642
      %v644 = vtanh.pop %v622
      %v645 = vsel %vm526, %v644, %v643
      %v646 = vmul.f32 %v645, %v591
      %648 = vrot.lane.b32.xlu0 %v645, 96
      %v649 = vpop.permute.xlu0 %648
      %v651 = vmul.f32 %v645, %v649
      %653 = vrot.lane.b32.xlu0 %v651, 96
      %v654 = vpop.permute.xlu0 %653
      %v656 = vadd.f32 %v646, %v654
      %v657 = vtanh.pop %v656
      %659 = vrot.lane.b32.xlu0 %v657, 96
      %v660 = vpop.permute.xlu0 %659
      %v662 = vmul.f32 %v645, %v660
      %664 = vrot.lane.b32.xlu0 %v662, 32
      %v665 = vpop.permute.xlu0 %664
      %s667 = scalar_lea.vmem %s6, 8
      %668 = vst.msk [vmem:[%s667] sm:$0xff] %vm543, %v665
      %v669 = vpack.c.bf16 %v662, %v662
      %s670 = scalar_lea.vmem [#allocation2], 16
      %v671 = vld [vmem:[%s670] sm:$0xff]
      %673 = vrot.lane.b32.xlu0 %v669, 32
      %v674 = vpop.permute.xlu0 %673
      %v676 = vsel %vm543, %v674, 0
      %678 = vmatpush.bf16.msra.mxu0 0
      %679 = vmatpush.bf16.msra.mxu0 0
      %680 = vmatpush.bf16.msra.mxu0 0
      %681 = vmatpush.bf16.msra.mxu0 0
      %682 = vmatpush.bf16.msra.mxu0 0
      %683 = vmatpush.bf16.msra.mxu0 0
      %684 = vmatpush.bf16.msra.mxu0 %v540
      %685 = vmatpush.bf16.msra.mxu0 %v539
      %686 = vmatmul.bf16.gmra.mxu0 %v676
      %v687 = vpop.f32.mrf.mxu0
      %v688 = vadd.f32 %v671, %v687
      %v689 = vpop.f32.mrf.mxu0
      %690 = vdwg.mxu0
      %v691 = vxor.u32 %v688, 2147483648
      %v692 = vmul.f32 %v691, 1.442695
      %v693 = vpow.pop %v692
      %v694 = vadd.f32 %v693, 1.0
      %v695 = vrcp.pop %v694
      %v696 = vmul.f32 %v694, %v695
      %v697 = vsub.f32 1.0, %v696
      %v698 = vmul.f32 %v695, %v697
      %v699 = vadd.f32 %v695, %v698
      %vm700 = vweird.f32 %v694
      %vm701 = vweird.f32 %v695
      %vm702 = vmor %vm700, %vm701
      %v703 = vsel %vm702, %v695, %v699
      %v704 = vand.u32 2147483647, %v694
      %vm705 = vcmp.eq.f32.partialorder %v704, 8.507059e+37
      %v706 = vand.u32 %v694, 2147483648
      %v707 = vor.u32 1.1754944e-38, %v706
      %v708 = vsel %vm705, %v707, %v703
      %v709 = vmul.f32 1.0, %v708
      %v710 = vtanh.pop %v688
      %v711 = vsel %vm526, %v710, %v709
      %v712 = vmul.f32 %v711, %v656
      %714 = vrot.lane.b32.xlu0 %v711, 96
      %v715 = vpop.permute.xlu0 %714
      %v717 = vmul.f32 %v711, %v715
      %719 = vrot.lane.b32.xlu0 %v717, 96
      %v720 = vpop.permute.xlu0 %719
      %v722 = vadd.f32 %v712, %v720
      %v723 = vtanh.pop %v722
      %725 = vrot.lane.b32.xlu0 %v723, 96
      %v726 = vpop.permute.xlu0 %725
      %v728 = vmul.f32 %v711, %v726
      %730 = vrot.lane.b32.xlu0 %v728, 32
      %v731 = vpop.permute.xlu0 %730
      %s733 = scalar_lea.vmem %s6, 16
      %734 = vst.msk [vmem:[%s733] sm:$0xff] %vm543, %v731
      %v735 = vpack.c.bf16 %v728, %v728
      %s736 = scalar_lea.vmem [#allocation2], 24
      %v737 = vld [vmem:[%s736] sm:$0xff]
      %739 = vrot.lane.b32.xlu0 %v735, 32
      %v740 = vpop.permute.xlu0 %739
      %v742 = vsel %vm543, %v740, 0
      %744 = vmatpush.bf16.msra.mxu0 0
      %745 = vmatpush.bf16.msra.mxu0 0
      %746 = vmatpush.bf16.msra.mxu0 0
      %747 = vmatpush.bf16.msra.mxu0 0
      %748 = vmatpush.bf16.msra.mxu0 0
      %749 = vmatpush.bf16.msra.mxu0 0
      %750 = vmatpush.bf16.msra.mxu0 %v540
      %751 = vmatpush.bf16.msra.mxu0 %v539
      %752 = vmatmul.bf16.gmra.mxu0 %v742
      %v753 = vpop.f32.mrf.mxu0
      %v754 = vadd.f32 %v737, %v753
      %v755 = vpop.f32.mrf.mxu0
      %756 = vdwg.mxu0
      %v757 = vxor.u32 %v754, 2147483648
      %v758 = vmul.f32 %v757, 1.442695
      %v759 = vpow.pop %v758
      %v760 = vadd.f32 %v759, 1.0
      %v761 = vrcp.pop %v760
      %v762 = vmul.f32 %v760, %v761
      %v763 = vsub.f32 1.0, %v762
      %v764 = vmul.f32 %v761, %v763
      %v765 = vadd.f32 %v761, %v764
      %vm766 = vweird.f32 %v760
      %vm767 = vweird.f32 %v761
      %vm768 = vmor %vm766, %vm767
      %v769 = vsel %vm768, %v761, %v765
      %v770 = vand.u32 2147483647, %v760
      %vm771 = vcmp.eq.f32.partialorder %v770, 8.507059e+37
      %v772 = vand.u32 %v760, 2147483648
      %v773 = vor.u32 1.1754944e-38, %v772
      %v774 = vsel %vm771, %v773, %v769
      %v775 = vmul.f32 1.0, %v774
      %v776 = vtanh.pop %v754
      %v777 = vsel %vm526, %v776, %v775
      %v778 = vmul.f32 %v777, %v722
      %780 = vrot.lane.b32.xlu0 %v777, 96
      %v781 = vpop.permute.xlu0 %780
      %v783 = vmul.f32 %v777, %v781
      %785 = vrot.lane.b32.xlu0 %v783, 96
      %v786 = vpop.permute.xlu0 %785
      %v788 = vadd.f32 %v778, %v786
      %v789 = vtanh.pop %v788
      %791 = vrot.lane.b32.xlu0 %v789, 96
      %v792 = vpop.permute.xlu0 %791
      %v794 = vmul.f32 %v777, %v792
      %796 = vrot.lane.b32.xlu0 %v794, 32
      %v797 = vpop.permute.xlu0 %796
      %s799 = scalar_lea.vmem %s6, 24
      %800 = vst.msk [vmem:[%s799] sm:$0xff] %vm543, %v797
      %v801 = vpack.c.bf16 %v794, %v794
      %s802 = scalar_lea.vmem [#allocation2], 32
      %v803 = vld [vmem:[%s802] sm:$0xff]
      %805 = vrot.lane.b32.xlu0 %v801, 32
      %v806 = vpop.permute.xlu0 %805
      %v808 = vsel %vm543, %v806, 0
      %810 = vmatpush.bf16.msra.mxu0 0
      %811 = vmatpush.bf16.msra.mxu0 0
      %812 = vmatpush.bf16.msra.mxu0 0
      %813 = vmatpush.bf16.msra.mxu0 0
      %814 = vmatpush.bf16.msra.mxu0 0
      %815 = vmatpush.bf16.msra.mxu0 0
      %816 = vmatpush.bf16.msra.mxu0 %v540
      %817 = vmatpush.bf16.msra.mxu0 %v539
      %818 = vmatmul.bf16.gmra.mxu0 %v808
      %v819 = vpop.f32.mrf.mxu0
      %v820 = vadd.f32 %v803, %v819
      %v821 = vpop.f32.mrf.mxu0
      %822 = vdwg.mxu0
      %v823 = vxor.u32 %v820, 2147483648
      %v824 = vmul.f32 %v823, 1.442695
      %v825 = vpow.pop %v824
      %v826 = vadd.f32 %v825, 1.0
      %v827 = vrcp.pop %v826
      %v828 = vmul.f32 %v826, %v827
      %v829 = vsub.f32 1.0, %v828
      %v830 = vmul.f32 %v827, %v829
      %v831 = vadd.f32 %v827, %v830
      %vm832 = vweird.f32 %v826
      %vm833 = vweird.f32 %v827
      %vm834 = vmor %vm832, %vm833
      %v835 = vsel %vm834, %v827, %v831
      %v836 = vand.u32 2147483647, %v826
      %vm837 = vcmp.eq.f32.partialorder %v836, 8.507059e+37
      %v838 = vand.u32 %v826, 2147483648
      %v839 = vor.u32 1.1754944e-38, %v838
      %v840 = vsel %vm837, %v839, %v835
      %v841 = vmul.f32 1.0, %v840
      %v842 = vtanh.pop %v820
      %v843 = vsel %vm526, %v842, %v841
      %v844 = vmul.f32 %v843, %v788
      %846 = vrot.lane.b32.xlu0 %v843, 96
      %v847 = vpop.permute.xlu0 %846
      %v849 = vmul.f32 %v843, %v847
      %851 = vrot.lane.b32.xlu0 %v849, 96
      %v852 = vpop.permute.xlu0 %851
      %v854 = vadd.f32 %v844, %v852
      %v855 = vtanh.pop %v854
      %857 = vrot.lane.b32.xlu0 %v855, 96
      %v858 = vpop.permute.xlu0 %857
      %v860 = vmul.f32 %v843, %v858
      %862 = vrot.lane.b32.xlu0 %v860, 32
      %v863 = vpop.permute.xlu0 %862
      %s865 = scalar_lea.vmem %s6, 32
      %866 = vst.msk [vmem:[%s865] sm:$0xff] %vm543, %v863
      %v867 = vpack.c.bf16 %v860, %v860
      %s868 = scalar_lea.vmem [#allocation2], 40
      %v869 = vld [vmem:[%s868] sm:$0xff]
      %871 = vrot.lane.b32.xlu0 %v867, 32
      %v872 = vpop.permute.xlu0 %871
      %v874 = vsel %vm543, %v872, 0
      %876 = vmatpush.bf16.msra.mxu0 0
      %877 = vmatpush.bf16.msra.mxu0 0
      %878 = vmatpush.bf16.msra.mxu0 0
      %879 = vmatpush.bf16.msra.mxu0 0
      %880 = vmatpush.bf16.msra.mxu0 0
      %881 = vmatpush.bf16.msra.mxu0 0
      %882 = vmatpush.bf16.msra.mxu0 %v540
      %883 = vmatpush.bf16.msra.mxu0 %v539
      %884 = vmatmul.bf16.gmra.mxu0 %v874
      %v885 = vpop.f32.mrf.mxu0
      %v886 = vadd.f32 %v869, %v885
      %v887 = vpop.f32.mrf.mxu0
      %888 = vdwg.mxu0
      %v889 = vxor.u32 %v886, 2147483648
      %v890 = vmul.f32 %v889, 1.442695
      %v891 = vpow.pop %v890
      %v892 = vadd.f32 %v891, 1.0
      %v893 = vrcp.pop %v892
      %v894 = vmul.f32 %v892, %v893
      %v895 = vsub.f32 1.0, %v894
      %v896 = vmul.f32 %v893, %v895
      %v897 = vadd.f32 %v893, %v896
      %vm898 = vweird.f32 %v892
      %vm899 = vweird.f32 %v893
      %vm900 = vmor %vm898, %vm899
      %v901 = vsel %vm900, %v893, %v897
      %v902 = vand.u32 2147483647, %v892
      %vm903 = vcmp.eq.f32.partialorder %v902, 8.507059e+37
      %v904 = vand.u32 %v892, 2147483648
      %v905 = vor.u32 1.1754944e-38, %v904
      %v906 = vsel %vm903, %v905, %v901
      %v907 = vmul.f32 1.0, %v906
      %v908 = vtanh.pop %v886
      %v909 = vsel %vm526, %v908, %v907
      %v910 = vmul.f32 %v909, %v854
      %912 = vrot.lane.b32.xlu0 %v909, 96
      %v913 = vpop.permute.xlu0 %912
      %v915 = vmul.f32 %v909, %v913
      %917 = vrot.lane.b32.xlu0 %v915, 96
      %v918 = vpop.permute.xlu0 %917
      %v920 = vadd.f32 %v910, %v918
      %v921 = vtanh.pop %v920
      %923 = vrot.lane.b32.xlu0 %v921, 96
      %v924 = vpop.permute.xlu0 %923
      %v926 = vmul.f32 %v909, %v924
      %928 = vrot.lane.b32.xlu0 %v926, 32
      %v929 = vpop.permute.xlu0 %928
      %s931 = scalar_lea.vmem %s6, 40
      %932 = vst.msk [vmem:[%s931] sm:$0xff] %vm543, %v929
      %v933 = vpack.c.bf16 %v926, %v926
      %s934 = scalar_lea.vmem [#allocation2], 48
      %v935 = vld [vmem:[%s934] sm:$0xff]
      %937 = vrot.lane.b32.xlu0 %v933, 32
      %v938 = vpop.permute.xlu0 %937
      %v940 = vsel %vm543, %v938, 0
      %942 = vmatpush.bf16.msra.mxu0 0
      %943 = vmatpush.bf16.msra.mxu0 0
      %944 = vmatpush.bf16.msra.mxu0 0
      %945 = vmatpush.bf16.msra.mxu0 0
      %946 = vmatpush.bf16.msra.mxu0 0
      %947 = vmatpush.bf16.msra.mxu0 0
      %948 = vmatpush.bf16.msra.mxu0 %v540
      %949 = vmatpush.bf16.msra.mxu0 %v539
      %950 = vmatmul.bf16.gmra.mxu0 %v940
      %v951 = vpop.f32.mrf.mxu0
      %v952 = vadd.f32 %v935, %v951
      %v953 = vpop.f32.mrf.mxu0
      %954 = vdwg.mxu0
      %v955 = vxor.u32 %v952, 2147483648
      %v956 = vmul.f32 %v955, 1.442695
      %v957 = vpow.pop %v956
      %v958 = vadd.f32 %v957, 1.0
      %v959 = vrcp.pop %v958
      %v960 = vmul.f32 %v958, %v959
      %v961 = vsub.f32 1.0, %v960
      %v962 = vmul.f32 %v959, %v961
      %v963 = vadd.f32 %v959, %v962
      %vm964 = vweird.f32 %v958
      %vm965 = vweird.f32 %v959
      %vm966 = vmor %vm964, %vm965
      %v967 = vsel %vm966, %v959, %v963
      %v968 = vand.u32 2147483647, %v958
      %vm969 = vcmp.eq.f32.partialorder %v968, 8.507059e+37
      %v970 = vand.u32 %v958, 2147483648
      %v971 = vor.u32 1.1754944e-38, %v970
      %v972 = vsel %vm969, %v971, %v967
      %v973 = vmul.f32 1.0, %v972
      %v974 = vtanh.pop %v952
      %v975 = vsel %vm526, %v974, %v973
      %v976 = vmul.f32 %v975, %v920
      %978 = vrot.lane.b32.xlu0 %v975, 96
      %v979 = vpop.permute.xlu0 %978
      %v981 = vmul.f32 %v975, %v979
      %983 = vrot.lane.b32.xlu0 %v981, 96
      %v984 = vpop.permute.xlu0 %983
      %v986 = vadd.f32 %v976, %v984
      %v987 = vtanh.pop %v986
      %989 = vrot.lane.b32.xlu0 %v987, 96
      %v990 = vpop.permute.xlu0 %989
      %v992 = vmul.f32 %v975, %v990
      %994 = vrot.lane.b32.xlu0 %v992, 32
      %v995 = vpop.permute.xlu0 %994
      %s997 = scalar_lea.vmem %s6, 48
      %998 = vst.msk [vmem:[%s997] sm:$0xff] %vm543, %v995
      %v999 = vpack.c.bf16 %v992, %v992
      %s1000 = scalar_lea.vmem [#allocation2], 56
      %v1001 = vld [vmem:[%s1000] sm:$0xff]
      %1003 = vrot.lane.b32.xlu0 %v999, 32
      %v1004 = vpop.permute.xlu0 %1003
      %v1006 = vsel %vm543, %v1004, 0
      %1008 = vmatpush.bf16.msra.mxu0 0
      %1009 = vmatpush.bf16.msra.mxu0 0
      %1010 = vmatpush.bf16.msra.mxu0 0
      %1011 = vmatpush.bf16.msra.mxu0 0
      %1012 = vmatpush.bf16.msra.mxu0 0
      %1013 = vmatpush.bf16.msra.mxu0 0
      %1014 = vmatpush.bf16.msra.mxu0 %v540
      %1015 = vmatpush.bf16.msra.mxu0 %v539
      %1016 = vmatmul.bf16.gmra.mxu0 %v1006
      %v1017 = vpop.f32.mrf.mxu0
      %v1018 = vadd.f32 %v1001, %v1017
      %v1019 = vpop.f32.mrf.mxu0
      %1020 = vdwg.mxu0
      %v1021 = vxor.u32 %v1018, 2147483648
      %v1022 = vmul.f32 %v1021, 1.442695
      %v1023 = vpow.pop %v1022
      %v1024 = vadd.f32 %v1023, 1.0
      %v1025 = vrcp.pop %v1024
      %v1026 = vmul.f32 %v1024, %v1025
      %v1027 = vsub.f32 1.0, %v1026
      %v1028 = vmul.f32 %v1025, %v1027
      %v1029 = vadd.f32 %v1025, %v1028
      %vm1030 = vweird.f32 %v1024
      %vm1031 = vweird.f32 %v1025
      %vm1032 = vmor %vm1030, %vm1031
      %v1033 = vsel %vm1032, %v1025, %v1029
      %v1034 = vand.u32 2147483647, %v1024
      %vm1035 = vcmp.eq.f32.partialorder %v1034, 8.507059e+37
      %v1036 = vand.u32 %v1024, 2147483648
      %v1037 = vor.u32 1.1754944e-38, %v1036
      %v1038 = vsel %vm1035, %v1037, %v1033
      %v1039 = vmul.f32 1.0, %v1038
      %v1040 = vtanh.pop %v1018
      %v1041 = vsel %vm526, %v1040, %v1039
      %v1042 = vmul.f32 %v1041, %v986
      %1044 = vrot.lane.b32.xlu0 %v1041, 96
      %v1045 = vpop.permute.xlu0 %1044
      %v1047 = vmul.f32 %v1041, %v1045
      %1049 = vrot.lane.b32.xlu0 %v1047, 96
      %v1050 = vpop.permute.xlu0 %1049
      %v1052 = vadd.f32 %v1042, %v1050
      %v1053 = vtanh.pop %v1052
      %1055 = vrot.lane.b32.xlu0 %v1053, 96
      %v1056 = vpop.permute.xlu0 %1055
      %v1058 = vmul.f32 %v1041, %v1056
      %1060 = vrot.lane.b32.xlu0 %v1058, 32
      %v1061 = vpop.permute.xlu0 %1060
      %s1063 = scalar_lea.vmem %s6, 56
      %1064 = vst.msk [vmem:[%s1063] sm:$0xff] %vm543, %v1061
      %1065 = vst.msk [vmem:[%s375] sm:$0xff] %vm543, %v1061
      %1066 = vst.msk [vmem:[%s379] sm:$0xff] %vm543, %v1052
      %p1067 = scmp.lt.s32.totalorder %s20, 1
      %s1068 = scalar_select %p1067, %s20, 1
      %s1069 = smul.addr %s1068, 8
      %s1070 = scalar_lea.vmem %s7, %s1069
      %p1071 = scmp.lt.s32.totalorder %s20, 1
      %s1072 = scalar_select %p1071, %s20, 1
      %s1073 = smul.addr %s1072, 8
      %s1074 = scalar_lea.vmem %s8, %s1073
      // Predicated region
      $region49: #{lstm_forward.1} parent=43 // pred_check
        %p1075 = pneg %p184
      $region50: #{lstm_forward.1} parent=43 // pred_check_branch
        %1077 = sbr.rel (%p1075) target = $region52
      $region51: #{lstm_forward.1} parent=43 // pred_region
        _
      $region52: #{lstm_forward.1} parent=43 // pred_fallthru
        _
      // Predicated region
      $region53: #{lstm_forward.1} parent=43 // pred_check
        %p1078 = pneg %p210
      $region54: #{lstm_forward.1} parent=43 // pred_check_branch
        %1080 = sbr.rel (%p1078) target = $region56
      $region55: #{lstm_forward.1} parent=43 // pred_region
        _
      $region56: #{lstm_forward.1} parent=43 // pred_fallthru
        _
      // Predicated region
      $region57: #{lstm_forward.1} parent=43 // pred_check
        %p1081 = pneg %p236
      $region58: #{lstm_forward.1} parent=43 // pred_check_branch
        %1083 = sbr.rel (%p1081) target = $region60
      $region59: #{lstm_forward.1} parent=43 // pred_region
        _
      $region60: #{lstm_forward.1} parent=43 // pred_fallthru
        _
      // Predicated region
      $region61: #{lstm_forward.1} parent=43 // pred_check
        %p1084 = pneg %p184
      $region62: #{lstm_forward.1} parent=43 // pred_check_branch
        %1086 = sbr.rel (%p1084) target = $region64
      $region63: #{lstm_forward.1} parent=43 // pred_region
        _
      $region64: #{lstm_forward.1} parent=43 // pred_fallthru
        _
    $region44: #{lstm_forward.1} parent=5 // pred_fallthru
      _
    %p1087 = scmp.le.s32.totalorder 2, %s15
    // Predicated region
    $region65: #{lstm_forward.1} parent=5 // pred_check
      %p1088 = pneg %p1087
    $region66: #{lstm_forward.1} parent=5 // pred_check_branch
      %1090 = sbr.rel (%p1088) target = $region68
    $region67: #{lstm_forward.1} parent=5 // pred_region
      %s1091 = ssub.s32 %s15, 2
      // Predicated region
      $region69: #{lstm_forward.1} parent=67 // pred_check
        %p1092 = pneg %p216
      $region70: #{lstm_forward.1} parent=67 // pred_check_branch
        %1094 = sbr.rel (%p1092) target = $region72
      $region71: #{lstm_forward.1} parent=67 // pred_region
        %p1095 = scmp.lt.s32.totalorder %s21, 1
        %s1096 = scalar_select %p1095, %s21, 1
        %s1097 = smul.addr %s1096, 8
        %s1098 = scalar_lea.vmem %s7, %s1097
      $region72: #{lstm_forward.1} parent=67 // pred_fallthru
        _
      // Predicated region
      $region73: #{lstm_forward.1} parent=67 // pred_check
        %p1099 = pneg %p242
      $region74: #{lstm_forward.1} parent=67 // pred_check_branch
        %1101 = sbr.rel (%p1099) target = $region76
      $region75: #{lstm_forward.1} parent=67 // pred_region
        %p1102 = scmp.lt.s32.totalorder %s21, 1
        %s1103 = scalar_select %p1102, %s21, 1
        %s1104 = smul.addr %s1103, 8
        %s1105 = scalar_lea.vmem %s8, %s1104
      $region76: #{lstm_forward.1} parent=67 // pred_fallthru
        _
    $region68: #{lstm_forward.1} parent=5 // pred_fallthru
      _
  $region6: #{lstm_forward.1} parent=0 // loop_footer
    %s19 = sadd.s32 1, %s15
  $region7: #{lstm_forward.1} parent=0 // loop_footer_branch
    %14 = sbr.rel target = $region3
  $region8: #{lstm_forward.1} parent=0 // loop_exit
    _

</llo_original>
